<compile_context>
chip_gen: v7x
topology: tpu7x:2x2x1
jax: 0.10.0
libtpu: 0.0.40
codegen_flags: <defaults>
</compile_context>

<pallas_src>
import math

import jax
import jax.numpy as jnp
from jax.experimental import pallas as pl
from jax.experimental.pallas import tpu as pltpu

# ---------------- small configuration consistent with the module -------------
SAMPLE_SIZE = (2, 16)      # (H, W)   (module default was [2, 240])
PATCH_SIZE  = (2, 2)
EMB_DIM     = 48           # divisible by NUM_HEADS
NUM_LAYERS  = 2
NUM_HEADS   = 3
MASK_RATIO  = 0.75
MLP_RATIO   = 4
HEAD_DIM    = EMB_DIM // NUM_HEADS
SCALE       = HEAD_DIM ** -0.5
LN_EPS      = 1e-5         # torch.nn.LayerNorm default
BATCH       = 2
INV_SQRT2   = 1.0 / math.sqrt(2.0)
NEG_BIG     = -1e30        # cross-batch attention mask value

H, W     = SAMPLE_SIZE
PH, PW   = PATCH_SIZE
HP, WP   = H // PH, W // PW
T_FULL   = HP * WP                         # number of patches
P_PIX    = PH * PW                         # pixels per patch (conv kernel flat)
HIDDEN   = MLP_RATIO * EMB_DIM
# same formula as the torch reference; exact for mask_ratio=0.75
REMAIN_T = int(T_FULL * (1 - MASK_RATIO))
SEQ      = REMAIN_T + 1                    # + cls token

VEC_PER_LAYER = 7                          # ln1_w ln1_b proj_b ln2_w ln2_b fc1_b fc2_b
N_VECS = NUM_LAYERS * VEC_PER_LAYER + 2    # + final LN w/b


# ------------------------------- kernel --------------------------------------
def _layer_norm(x, w, b):
    mu = jnp.mean(x, axis=-1, keepdims=True)
    xc = x - mu
    var = jnp.mean(xc * xc, axis=-1, keepdims=True)
    return xc * jax.lax.rsqrt(var + LN_EPS) * w + b


def _build_encoder_call(Bn):
    seq_rows = Bn * SEQ
    tok_rows = Bn * T_FULL
    C, D = EMB_DIM, HEAD_DIM
    f32, bf16 = jnp.float32, jnp.bfloat16

    def kernel(px_ref, pw_ref, pos_ref, sel_ref, cls_ref, amask_ref, vec_ref,
               wqkv_ref, wproj_ref, wfc1_ref, wfc2_ref, out_ref):
        # ---- patchify every token of every batch element in ONE MXU call ----
        emb_all = jnp.dot(px_ref[...], pw_ref[...],
                          preferred_element_type=f32) + pos_ref[...]       # (Bn*T, C)
        # ---- block-diagonal one-hot gather of kept tokens (zero rows at the
        #      cls slots) + precomputed cls rows -> (Bn*SEQ, C) working set ---
        x = jnp.dot(sel_ref[...], emb_all,
                    preferred_element_type=f32) + cls_ref[...]             # (Bn*SEQ, C)

        amask = amask_ref[...]                                             # (rows, rows)
        vecs = vec_ref[...]                                                # (N_VECS, HIDDEN)

        for l in range(NUM_LAYERS):
            r = VEC_PER_LAYER * l
            ln1_w, ln1_b = vecs[r:r + 1, :C],     vecs[r + 1:r + 2, :C]
            proj_b       = vecs[r + 2:r + 3, :C]
            ln2_w, ln2_b = vecs[r + 3:r + 4, :C], vecs[r + 4:r + 5, :C]
            fc1_b        = vecs[r + 5:r + 6, :]                            # (1, HIDDEN)
            fc2_b        = vecs[r + 6:r + 7, :C]

            # ---- multi-head self-attention, batched over all Bn*SEQ rows ----
            h = _layer_norm(x, ln1_w, ln1_b)
            qkv = jnp.dot(h.astype(bf16), wqkv_ref[l],
                          preferred_element_type=f32)                      # (rows, 3C)
            heads = []
            for hd in range(NUM_HEADS):
                off = hd * 3 * D                     # head-major [h, (q|k|v), d]
                qh = qkv[:, off:off + D].astype(bf16)
                kh = qkv[:, off + D:off + 2 * D].astype(bf16)
                vh = qkv[:, off + 2 * D:off + 3 * D].astype(bf16)
                # full (rows, rows) scores; cross-batch pairs masked to -1e30
                s = jax.lax.dot_general(
                    qh, kh, (((1,), (1,)), ((), ())),
                    preferred_element_type=f32) * SCALE + amask
                s = s - jnp.max(s, axis=-1, keepdims=True)
                p = jnp.exp(s)
                p = p * pl.reciprocal(jnp.sum(p, axis=-1, keepdims=True),
                                      approx=True)
                heads.append(jnp.dot(p.astype(bf16), vh,
                                     preferred_element_type=f32))
            attn = jnp.concatenate(heads, axis=1)                          # (rows, C)
            attn = jnp.dot(attn.astype(bf16), wproj_ref[l],
                           preferred_element_type=f32) + proj_b
            x = x + attn

            # ---- MLP with exact (erf) GELU, fp32 elementwise ----------------
            h = _layer_norm(x, ln2_w, ln2_b)
            h1 = jnp.dot(h.astype(bf16), wfc1_ref[l],
                         preferred_element_type=f32) + fc1_b               # (rows, HIDDEN)
            h1 = 0.5 * h1 * (1.0 + jax.lax.erf(h1 * INV_SQRT2))
            h2 = jnp.dot(h1.astype(bf16), wfc2_ref[l],
                         preferred_element_type=f32) + fc2_b
            x = x + h2

        rf = VEC_PER_LAYER * NUM_LAYERS
        out_ref[...] = _layer_norm(x, vecs[rf:rf + 1, :C], vecs[rf + 1:rf + 2, :C])

    def full(shape):   # whole-array block, single grid step
        return pl.BlockSpec(shape, lambda i, s=shape: (0,) * len(s))

    return pl.pallas_call(
        kernel,
        out_shape=jax.ShapeDtypeStruct((seq_rows, EMB_DIM), jnp.float32),
        grid=(1,),
        in_specs=[
            full((tok_rows, P_PIX)),                      # px2d        bf16
            full((P_PIX, EMB_DIM)),                       # patch_w     bf16
            full((tok_rows, EMB_DIM)),                    # pos_tiled   f32
            full((seq_rows, tok_rows)),                   # sel         f32
            full((seq_rows, EMB_DIM)),                    # cls_rows    f32
            full((seq_rows, seq_rows)),                   # attn mask   f32
            full((N_VECS, HIDDEN)),                       # vec_slab    f32
            full((NUM_LAYERS, EMB_DIM, 3 * EMB_DIM)),     # wqkv_slab   bf16
            full((NUM_LAYERS, EMB_DIM, EMB_DIM)),         # wproj_slab  bf16
            full((NUM_LAYERS, EMB_DIM, HIDDEN)),          # wfc1_slab   bf16
            full((NUM_LAYERS, HIDDEN, EMB_DIM)),          # wfc2_slab   bf16
        ],
        out_specs=full((seq_rows, EMB_DIM)),
        compiler_params=pltpu.CompilerParams(dimension_semantics=("arbitrary",)),
    )


# --------------------------- parameter construction --------------------------
def init_params(key):
    ks = iter(jax.random.split(key, 32))

    def tn(shape):  # trunc_normal_(std=0.02) approximated by normal*0.02
        return 0.02 * jax.random.normal(next(ks), shape, jnp.float32)

    p = {}
    p["cls_token"] = tn((1, EMB_DIM))
    pos     = tn((T_FULL, EMB_DIM))
    patch_b = tn((1, EMB_DIM))
    p["pos_plus_bias"] = pos + patch_b                            # conv bias folded in
    p["patch_w"] = tn((P_PIX, EMB_DIM)).astype(jnp.bfloat16)      # Conv2d as matmul

    def pad_vec(v):
        return jnp.pad(v, (0, HIDDEN - v.shape[0]))

    vec_rows, wqkv_l, wproj_l, wfc1_l, wfc2_l = [], [], [], [], []
    for _ in range(NUM_LAYERS):
        vec_rows += [pad_vec(jnp.ones((EMB_DIM,), jnp.float32)),   # ln1 w
                     pad_vec(jnp.zeros((EMB_DIM,), jnp.float32)),  # ln1 b
                     pad_vec(tn((EMB_DIM,))),                      # proj b
                     pad_vec(jnp.ones((EMB_DIM,), jnp.float32)),   # ln2 w
                     pad_vec(jnp.zeros((EMB_DIM,), jnp.float32)),  # ln2 b
                     tn((HIDDEN,)),                                # fc1 b
                     pad_vec(tn((EMB_DIM,)))]                      # fc2 b
        # head-major qkv column layout: [head, {q|k|v}, head_dim]
        wqkv_l.append(tn((EMB_DIM, NUM_HEADS, 3 * HEAD_DIM)).reshape(EMB_DIM, 3 * EMB_DIM))
        wproj_l.append(tn((EMB_DIM, EMB_DIM)))
        wfc1_l.append(tn((EMB_DIM, HIDDEN)))
        wfc2_l.append(tn((HIDDEN, EMB_DIM)))
    vec_rows += [pad_vec(jnp.ones((EMB_DIM,), jnp.float32)),       # final LN w
                 pad_vec(jnp.zeros((EMB_DIM,), jnp.float32))]      # final LN b

    p["vec_slab"]   = jnp.stack(vec_rows, axis=0)                        # (N_VECS, HIDDEN) f32
    p["wqkv_slab"]  = jnp.stack(wqkv_l,  axis=0).astype(jnp.bfloat16)    # (L, C, 3C)
    p["wproj_slab"] = jnp.stack(wproj_l, axis=0).astype(jnp.bfloat16)    # (L, C, C)
    p["wfc1_slab"]  = jnp.stack(wfc1_l,  axis=0).astype(jnp.bfloat16)    # (L, C, HIDDEN)
    p["wfc2_slab"]  = jnp.stack(wfc2_l,  axis=0).astype(jnp.bfloat16)    # (L, HIDDEN, C)
    return p


# ------------------------------- forward pass --------------------------------
@jax.jit
def _forward_jit(params, x, shuffle_key):
    Bn = x.shape[0]

    # PatchShuffle indexes: vmapped permutation + argsort, all inside this jit
    # (replaces the torch module's host-side np.random.shuffle).
    keys = jax.random.split(shuffle_key, Bn)
    perms = jax.vmap(lambda k: jax.random.permutation(k, T_FULL))(keys)     # (B, T)
    forward_indexes = jnp.transpose(perms).astype(jnp.int32)                # (T, B)
    backward_indexes = jnp.argsort(forward_indexes, axis=0).astype(jnp.int32)
    kept = forward_indexes[:REMAIN_T]                                       # (R, B)

    # block-diagonal one-hot selection matrix; zero rows at the cls positions
    cols = kept.T + jnp.arange(Bn, dtype=jnp.int32)[:, None] * T_FULL       # (B, R)
    oh = jax.nn.one_hot(cols, Bn * T_FULL, dtype=jnp.float32)               # (B, R, B*T)
    sel = jnp.concatenate(
        [jnp.zeros((Bn, 1, Bn * T_FULL), jnp.float32), oh], axis=1
    ).reshape(Bn * SEQ, Bn * T_FULL)

    # cls token rows (non-zero only at row b*SEQ) and cross-batch attention mask
    row_ids  = jnp.arange(Bn * SEQ)
    cls_rows = (row_ids % SEQ == 0).astype(jnp.float32)[:, None] * params["cls_token"]
    bid   = row_ids // SEQ
    amask = jnp.where(bid[:, None] == bid[None, :], 0.0, NEG_BIG).astype(jnp.float32)

    pos_tiled = jnp.tile(params["pos_plus_bias"], (Bn, 1))                  # (B*T, C)

    # glue: extract non-overlapping patches -> (B*T, ph*pw), token t = h*WP + w
    px2d = x[:, 0].reshape(Bn, HP, PH, WP, PW).transpose(0, 1, 3, 2, 4) \
                  .reshape(Bn * T_FULL, P_PIX).astype(jnp.bfloat16)

    feats2d = _build_encoder_call(Bn)(
        px2d, params["patch_w"], pos_tiled, sel, cls_rows, amask,
        params["vec_slab"], params["wqkv_slab"], params["wproj_slab"],
        params["wfc1_slab"], params["wfc2_slab"])                           # (B*SEQ, C)

    features = feats2d.reshape(Bn, SEQ, EMB_DIM).transpose(1, 0, 2)         # (SEQ, B, C)
    return features, backward_indexes, forward_indexes


def mae_encoder_forward(params, x, shuffle_key):
    # layout: x is NCHW float32 (B, 1, H, W), identical to the PyTorch module.
    features, backward_indexes, forward_indexes = _forward_jit(params, x, shuffle_key)
    return features, backward_indexes, forward_indexes, REMAIN_T


if __name__ == "__main__":
    root = jax.random.PRNGKey(0)
    k_x, k_param, k_shuffle = jax.random.split(root, 3)
    params = init_params(k_param)
    x = jax.random.normal(k_x, (BATCH, 1, H, W), jnp.float32)

    features, backward_indexes, forward_indexes, remain_T = mae_encoder_forward(
        params, x, k_shuffle)
    jax.block_until_ready(features)

    assert features.shape == (remain_T + 1, BATCH, EMB_DIM)
    assert backward_indexes.shape == (T_FULL, BATCH)
    assert forward_indexes.shape == (T_FULL, BATCH)
    assert bool(jnp.all(jnp.isfinite(features)))
    print("KERNEL_OK")
</pallas_src>

<mosaic_0001>
module attributes {stable_mosaic.version = 11 : i64} {
  func.func @kernel(%arg0: i32, %arg1: memref<16x4xbf16, #tpu.memory_space<vmem>>, %arg2: memref<4x48xbf16, #tpu.memory_space<vmem>>, %arg3: memref<16x48xf32, #tpu.memory_space<vmem>>, %arg4: memref<6x16xf32, #tpu.memory_space<vmem>>, %arg5: memref<6x48xf32, #tpu.memory_space<vmem>>, %arg6: memref<6x6xf32, #tpu.memory_space<vmem>>, %arg7: memref<16x192xf32, #tpu.memory_space<vmem>>, %arg8: memref<2x48x144xbf16, #tpu.memory_space<vmem>>, %arg9: memref<2x48x48xbf16, #tpu.memory_space<vmem>>, %arg10: memref<2x48x192xbf16, #tpu.memory_space<vmem>>, %arg11: memref<2x192x48xbf16, #tpu.memory_space<vmem>>, %arg12: memref<6x48xf32, #tpu.memory_space<vmem>>) attributes {dimension_semantics = [#tpu.dimension_semantics<arbitrary>], iteration_bounds = array<i64: 1>, scalar_prefetch = 0 : i64, scratch_operands = 0 : i64, tpu.core_type = #tpu.core_type<tc>, window_params = [{pipeline_mode = #tpu.pipeline_mode<synchronous>, transform_indices = @transform_0, window_bounds = array<i64: 16, 4>}, {pipeline_mode = #tpu.pipeline_mode<synchronous>, transform_indices = @transform_1, window_bounds = array<i64: 4, 48>}, {pipeline_mode = #tpu.pipeline_mode<synchronous>, transform_indices = @transform_2, window_bounds = array<i64: 16, 48>}, {pipeline_mode = #tpu.pipeline_mode<synchronous>, transform_indices = @transform_3, window_bounds = array<i64: 6, 16>}, {pipeline_mode = #tpu.pipeline_mode<synchronous>, transform_indices = @transform_4, window_bounds = array<i64: 6, 48>}, {pipeline_mode = #tpu.pipeline_mode<synchronous>, transform_indices = @transform_5, window_bounds = array<i64: 6, 6>}, {pipeline_mode = #tpu.pipeline_mode<synchronous>, transform_indices = @transform_6, window_bounds = array<i64: 16, 192>}, {pipeline_mode = #tpu.pipeline_mode<synchronous>, transform_indices = @transform_7, window_bounds = array<i64: 2, 48, 144>}, {pipeline_mode = #tpu.pipeline_mode<synchronous>, transform_indices = @transform_8, window_bounds = array<i64: 2, 48, 48>}, {pipeline_mode = #tpu.pipeline_mode<synchronous>, transform_indices = @transform_9, window_bounds = array<i64: 2, 48, 192>}, {pipeline_mode = #tpu.pipeline_mode<synchronous>, transform_indices = @transform_10, window_bounds = array<i64: 2, 192, 48>}, {pipeline_mode = #tpu.pipeline_mode<synchronous>, transform_indices = @transform_11, window_bounds = array<i64: 6, 48>}]} {
    %c0 = arith.constant 0 : index
    %c0_0 = arith.constant 0 : index
    %0 = vector.load %arg1[%c0, %c0_0] : memref<16x4xbf16, #tpu.memory_space<vmem>>, vector<16x4xbf16>
    %c0_1 = arith.constant 0 : index
    %c0_2 = arith.constant 0 : index
    %1 = vector.load %arg2[%c0_1, %c0_2] : memref<4x48xbf16, #tpu.memory_space<vmem>>, vector<4x48xbf16>
    %cst = arith.constant dense<0.000000e+00> : vector<16x48xf32>
    %2 = tpu.matmul %0, %1, %cst {dimension_numbers = #tpu.dot_dimension_numbers<[1], [0], [0], [1], [0, 0, 1, 1], [], []>} : vector<16x4xbf16>, vector<4x48xbf16>, vector<16x48xf32> -> vector<16x48xf32>
    %c0_3 = arith.constant 0 : index
    %c0_4 = arith.constant 0 : index
    %3 = vector.load %arg3[%c0_3, %c0_4] : memref<16x48xf32, #tpu.memory_space<vmem>>, vector<16x48xf32>
    %4 = arith.addf %2, %3 : vector<16x48xf32>
    %c0_5 = arith.constant 0 : index
    %c0_6 = arith.constant 0 : index
    %5 = vector.load %arg4[%c0_5, %c0_6] : memref<6x16xf32, #tpu.memory_space<vmem>>, vector<6x16xf32>
    %cst_7 = arith.constant dense<0.000000e+00> : vector<6x48xf32>
    %6 = tpu.matmul %5, %4, %cst_7 {dimension_numbers = #tpu.dot_dimension_numbers<[1], [0], [0], [1], [0, 0, 1, 1], [], []>} : vector<6x16xf32>, vector<16x48xf32>, vector<6x48xf32> -> vector<6x48xf32>
    %c0_8 = arith.constant 0 : index
    %c0_9 = arith.constant 0 : index
    %7 = vector.load %arg5[%c0_8, %c0_9] : memref<6x48xf32, #tpu.memory_space<vmem>>, vector<6x48xf32>
    %8 = arith.addf %6, %7 : vector<6x48xf32>
    %c0_10 = arith.constant 0 : index
    %c0_11 = arith.constant 0 : index
    %9 = vector.load %arg6[%c0_10, %c0_11] : memref<6x6xf32, #tpu.memory_space<vmem>>, vector<6x6xf32>
    %c0_12 = arith.constant 0 : index
    %c0_13 = arith.constant 0 : index
    %10 = vector.load %arg7[%c0_12, %c0_13] : memref<16x192xf32, #tpu.memory_space<vmem>>, vector<16x192xf32>
    %11 = vector.extract_strided_slice %10 {offsets = [0, 0], sizes = [1, 48], strides = [1, 1]} : vector<16x192xf32> to vector<1x48xf32>
    %12 = vector.extract_strided_slice %10 {offsets = [1, 0], sizes = [1, 48], strides = [1, 1]} : vector<16x192xf32> to vector<1x48xf32>
    %13 = vector.extract_strided_slice %10 {offsets = [2, 0], sizes = [1, 48], strides = [1, 1]} : vector<16x192xf32> to vector<1x48xf32>
    %14 = vector.extract_strided_slice %10 {offsets = [3, 0], sizes = [1, 48], strides = [1, 1]} : vector<16x192xf32> to vector<1x48xf32>
    %15 = vector.extract_strided_slice %10 {offsets = [4, 0], sizes = [1, 48], strides = [1, 1]} : vector<16x192xf32> to vector<1x48xf32>
    %16 = vector.extract_strided_slice %10 {offsets = [5, 0], sizes = [1, 192], strides = [1, 1]} : vector<16x192xf32> to vector<1x192xf32>
    %17 = vector.extract_strided_slice %10 {offsets = [6, 0], sizes = [1, 48], strides = [1, 1]} : vector<16x192xf32> to vector<1x48xf32>
    %cst_14 = arith.constant dense<0.000000e+00> : vector<6xf32>
    %18 = vector.multi_reduction <add>, %8, %cst_14 [1] : vector<6x48xf32> to vector<6xf32>
    %19 = vector.shape_cast %18 : vector<6xf32> to vector<6x1xf32>
    %cst_15 = arith.constant 4.800000e+01 : f32
    %20 = vector.broadcast %cst_15 : f32 to vector<6x1xf32>
    %21 = arith.divf %19, %20 : vector<6x1xf32>
    %22 = vector.broadcast %21 : vector<6x1xf32> to vector<6x48xf32>
    %23 = arith.subf %8, %22 : vector<6x48xf32>
    %24 = arith.mulf %23, %23 : vector<6x48xf32>
    %cst_16 = arith.constant dense<0.000000e+00> : vector<6xf32>
    %25 = vector.multi_reduction <add>, %24, %cst_16 [1] : vector<6x48xf32> to vector<6xf32>
    %26 = vector.shape_cast %25 : vector<6xf32> to vector<6x1xf32>
    %cst_17 = arith.constant 4.800000e+01 : f32
    %27 = vector.broadcast %cst_17 : f32 to vector<6x1xf32>
    %28 = arith.divf %26, %27 : vector<6x1xf32>
    %cst_18 = arith.constant 9.99999974E-6 : f32
    %29 = vector.broadcast %cst_18 : f32 to vector<6x1xf32>
    %30 = arith.addf %28, %29 : vector<6x1xf32>
    %31 = math.rsqrt %30 : vector<6x1xf32>
    %32 = vector.broadcast %31 : vector<6x1xf32> to vector<6x48xf32>
    %33 = arith.mulf %23, %32 : vector<6x48xf32>
    %34 = vector.broadcast %11 : vector<1x48xf32> to vector<6x48xf32>
    %35 = arith.mulf %33, %34 : vector<6x48xf32>
    %36 = vector.broadcast %12 : vector<1x48xf32> to vector<6x48xf32>
    %37 = arith.addf %35, %36 : vector<6x48xf32>
    %38 = arith.truncf %37 : vector<6x48xf32> to vector<6x48xbf16>
    %c0_19 = arith.constant 0 : index
    %c0_20 = arith.constant 0 : index
    %c0_21 = arith.constant 0 : index
    %39 = vector.load %arg8[%c0_19, %c0_20, %c0_21] : memref<2x48x144xbf16, #tpu.memory_space<vmem>>, vector<1x48x144xbf16>
    %40 = vector.shape_cast %39 : vector<1x48x144xbf16> to vector<48x144xbf16>
    %cst_22 = arith.constant dense<0.000000e+00> : vector<6x144xf32>
    %41 = tpu.matmul %38, %40, %cst_22 {dimension_numbers = #tpu.dot_dimension_numbers<[1], [0], [0], [1], [0, 0, 1, 1], [], []>} : vector<6x48xbf16>, vector<48x144xbf16>, vector<6x144xf32> -> vector<6x144xf32>
    %42 = vector.extract_strided_slice %41 {offsets = [0, 0], sizes = [6, 16], strides = [1, 1]} : vector<6x144xf32> to vector<6x16xf32>
    %43 = arith.truncf %42 : vector<6x16xf32> to vector<6x16xbf16>
    %44 = vector.extract_strided_slice %41 {offsets = [0, 16], sizes = [6, 16], strides = [1, 1]} : vector<6x144xf32> to vector<6x16xf32>
    %45 = arith.truncf %44 : vector<6x16xf32> to vector<6x16xbf16>
    %46 = vector.extract_strided_slice %41 {offsets = [0, 32], sizes = [6, 16], strides = [1, 1]} : vector<6x144xf32> to vector<6x16xf32>
    %47 = arith.truncf %46 : vector<6x16xf32> to vector<6x16xbf16>
    %cst_23 = arith.constant dense<0.000000e+00> : vector<6x6xf32>
    %48 = tpu.matmul %43, %45, %cst_23 {dimension_numbers = #tpu.dot_dimension_numbers<[1], [1], [0], [0], [0, 0, 1, 0], [], []>} : vector<6x16xbf16>, vector<6x16xbf16>, vector<6x6xf32> -> vector<6x6xf32>
    %cst_24 = arith.constant 2.500000e-01 : f32
    %49 = vector.broadcast %cst_24 : f32 to vector<6x6xf32>
    %50 = arith.mulf %48, %49 : vector<6x6xf32>
    %51 = arith.addf %50, %9 : vector<6x6xf32>
    %cst_25 = arith.constant dense<0xFF800000> : vector<6xf32>
    %52 = vector.multi_reduction <maximumf>, %51, %cst_25 [1] : vector<6x6xf32> to vector<6xf32>
    %53 = vector.shape_cast %52 : vector<6xf32> to vector<6x1xf32>
    %54 = vector.broadcast %53 : vector<6x1xf32> to vector<6x6xf32>
    %55 = arith.subf %51, %54 : vector<6x6xf32>
    %56 = math.exp %55 : vector<6x6xf32>
    %cst_26 = arith.constant dense<0.000000e+00> : vector<6xf32>
    %57 = vector.multi_reduction <add>, %56, %cst_26 [1] : vector<6x6xf32> to vector<6xf32>
    %58 = vector.shape_cast %57 : vector<6xf32> to vector<6x1xf32>
    %59 = tpu.reciprocal %58 {approx = true} : vector<6x1xf32> -> vector<6x1xf32>
    %60 = vector.broadcast %59 : vector<6x1xf32> to vector<6x6xf32>
    %61 = arith.mulf %56, %60 : vector<6x6xf32>
    %62 = arith.truncf %61 : vector<6x6xf32> to vector<6x6xbf16>
    %cst_27 = arith.constant dense<0.000000e+00> : vector<6x16xf32>
    %63 = tpu.matmul %62, %47, %cst_27 {dimension_numbers = #tpu.dot_dimension_numbers<[1], [0], [0], [1], [0, 0, 1, 1], [], []>} : vector<6x6xbf16>, vector<6x16xbf16>, vector<6x16xf32> -> vector<6x16xf32>
    %64 = vector.extract_strided_slice %41 {offsets = [0, 48], sizes = [6, 16], strides = [1, 1]} : vector<6x144xf32> to vector<6x16xf32>
    %65 = arith.truncf %64 : vector<6x16xf32> to vector<6x16xbf16>
    %66 = vector.extract_strided_slice %41 {offsets = [0, 64], sizes = [6, 16], strides = [1, 1]} : vector<6x144xf32> to vector<6x16xf32>
    %67 = arith.truncf %66 : vector<6x16xf32> to vector<6x16xbf16>
    %68 = vector.extract_strided_slice %41 {offsets = [0, 80], sizes = [6, 16], strides = [1, 1]} : vector<6x144xf32> to vector<6x16xf32>
    %69 = arith.truncf %68 : vector<6x16xf32> to vector<6x16xbf16>
    %cst_28 = arith.constant dense<0.000000e+00> : vector<6x6xf32>
    %70 = tpu.matmul %65, %67, %cst_28 {dimension_numbers = #tpu.dot_dimension_numbers<[1], [1], [0], [0], [0, 0, 1, 0], [], []>} : vector<6x16xbf16>, vector<6x16xbf16>, vector<6x6xf32> -> vector<6x6xf32>
    %cst_29 = arith.constant 2.500000e-01 : f32
    %71 = vector.broadcast %cst_29 : f32 to vector<6x6xf32>
    %72 = arith.mulf %70, %71 : vector<6x6xf32>
    %73 = arith.addf %72, %9 : vector<6x6xf32>
    %cst_30 = arith.constant dense<0xFF800000> : vector<6xf32>
    %74 = vector.multi_reduction <maximumf>, %73, %cst_30 [1] : vector<6x6xf32> to vector<6xf32>
    %75 = vector.shape_cast %74 : vector<6xf32> to vector<6x1xf32>
    %76 = vector.broadcast %75 : vector<6x1xf32> to vector<6x6xf32>
    %77 = arith.subf %73, %76 : vector<6x6xf32>
    %78 = math.exp %77 : vector<6x6xf32>
    %cst_31 = arith.constant dense<0.000000e+00> : vector<6xf32>
    %79 = vector.multi_reduction <add>, %78, %cst_31 [1] : vector<6x6xf32> to vector<6xf32>
    %80 = vector.shape_cast %79 : vector<6xf32> to vector<6x1xf32>
    %81 = tpu.reciprocal %80 {approx = true} : vector<6x1xf32> -> vector<6x1xf32>
    %82 = vector.broadcast %81 : vector<6x1xf32> to vector<6x6xf32>
    %83 = arith.mulf %78, %82 : vector<6x6xf32>
    %84 = arith.truncf %83 : vector<6x6xf32> to vector<6x6xbf16>
    %cst_32 = arith.constant dense<0.000000e+00> : vector<6x16xf32>
    %85 = tpu.matmul %84, %69, %cst_32 {dimension_numbers = #tpu.dot_dimension_numbers<[1], [0], [0], [1], [0, 0, 1, 1], [], []>} : vector<6x6xbf16>, vector<6x16xbf16>, vector<6x16xf32> -> vector<6x16xf32>
    %86 = vector.extract_strided_slice %41 {offsets = [0, 96], sizes = [6, 16], strides = [1, 1]} : vector<6x144xf32> to vector<6x16xf32>
    %87 = arith.truncf %86 : vector<6x16xf32> to vector<6x16xbf16>
    %88 = vector.extract_strided_slice %41 {offsets = [0, 112], sizes = [6, 16], strides = [1, 1]} : vector<6x144xf32> to vector<6x16xf32>
    %89 = arith.truncf %88 : vector<6x16xf32> to vector<6x16xbf16>
    %90 = vector.extract_strided_slice %41 {offsets = [0, 128], sizes = [6, 16], strides = [1, 1]} : vector<6x144xf32> to vector<6x16xf32>
    %91 = arith.truncf %90 : vector<6x16xf32> to vector<6x16xbf16>
    %cst_33 = arith.constant dense<0.000000e+00> : vector<6x6xf32>
    %92 = tpu.matmul %87, %89, %cst_33 {dimension_numbers = #tpu.dot_dimension_numbers<[1], [1], [0], [0], [0, 0, 1, 0], [], []>} : vector<6x16xbf16>, vector<6x16xbf16>, vector<6x6xf32> -> vector<6x6xf32>
    %cst_34 = arith.constant 2.500000e-01 : f32
    %93 = vector.broadcast %cst_34 : f32 to vector<6x6xf32>
    %94 = arith.mulf %92, %93 : vector<6x6xf32>
    %95 = arith.addf %94, %9 : vector<6x6xf32>
    %cst_35 = arith.constant dense<0xFF800000> : vector<6xf32>
    %96 = vector.multi_reduction <maximumf>, %95, %cst_35 [1] : vector<6x6xf32> to vector<6xf32>
    %97 = vector.shape_cast %96 : vector<6xf32> to vector<6x1xf32>
    %98 = vector.broadcast %97 : vector<6x1xf32> to vector<6x6xf32>
    %99 = arith.subf %95, %98 : vector<6x6xf32>
    %100 = math.exp %99 : vector<6x6xf32>
    %cst_36 = arith.constant dense<0.000000e+00> : vector<6xf32>
    %101 = vector.multi_reduction <add>, %100, %cst_36 [1] : vector<6x6xf32> to vector<6xf32>
    %102 = vector.shape_cast %101 : vector<6xf32> to vector<6x1xf32>
    %103 = tpu.reciprocal %102 {approx = true} : vector<6x1xf32> -> vector<6x1xf32>
    %104 = vector.broadcast %103 : vector<6x1xf32> to vector<6x6xf32>
    %105 = arith.mulf %100, %104 : vector<6x6xf32>
    %106 = arith.truncf %105 : vector<6x6xf32> to vector<6x6xbf16>
    %cst_37 = arith.constant dense<0.000000e+00> : vector<6x16xf32>
    %107 = tpu.matmul %106, %91, %cst_37 {dimension_numbers = #tpu.dot_dimension_numbers<[1], [0], [0], [1], [0, 0, 1, 1], [], []>} : vector<6x6xbf16>, vector<6x16xbf16>, vector<6x16xf32> -> vector<6x16xf32>
    %108 = tpu.concatenate %63, %85, %107 in 1 : vector<6x16xf32>, vector<6x16xf32>, vector<6x16xf32> -> vector<6x48xf32>
    %109 = arith.truncf %108 : vector<6x48xf32> to vector<6x48xbf16>
    %c0_38 = arith.constant 0 : index
    %c0_39 = arith.constant 0 : index
    %c0_40 = arith.constant 0 : index
    %110 = vector.load %arg9[%c0_38, %c0_39, %c0_40] : memref<2x48x48xbf16, #tpu.memory_space<vmem>>, vector<1x48x48xbf16>
    %111 = vector.shape_cast %110 : vector<1x48x48xbf16> to vector<48x48xbf16>
    %cst_41 = arith.constant dense<0.000000e+00> : vector<6x48xf32>
    %112 = tpu.matmul %109, %111, %cst_41 {dimension_numbers = #tpu.dot_dimension_numbers<[1], [0], [0], [1], [0, 0, 1, 1], [], []>} : vector<6x48xbf16>, vector<48x48xbf16>, vector<6x48xf32> -> vector<6x48xf32>
    %113 = vector.broadcast %13 : vector<1x48xf32> to vector<6x48xf32>
    %114 = arith.addf %112, %113 : vector<6x48xf32>
    %115 = arith.addf %8, %114 : vector<6x48xf32>
    %cst_42 = arith.constant dense<0.000000e+00> : vector<6xf32>
    %116 = vector.multi_reduction <add>, %115, %cst_42 [1] : vector<6x48xf32> to vector<6xf32>
    %117 = vector.shape_cast %116 : vector<6xf32> to vector<6x1xf32>
    %cst_43 = arith.constant 4.800000e+01 : f32
    %118 = vector.broadcast %cst_43 : f32 to vector<6x1xf32>
    %119 = arith.divf %117, %118 : vector<6x1xf32>
    %120 = vector.broadcast %119 : vector<6x1xf32> to vector<6x48xf32>
    %121 = arith.subf %115, %120 : vector<6x48xf32>
    %122 = arith.mulf %121, %121 : vector<6x48xf32>
    %cst_44 = arith.constant dense<0.000000e+00> : vector<6xf32>
    %123 = vector.multi_reduction <add>, %122, %cst_44 [1] : vector<6x48xf32> to vector<6xf32>
    %124 = vector.shape_cast %123 : vector<6xf32> to vector<6x1xf32>
    %cst_45 = arith.constant 4.800000e+01 : f32
    %125 = vector.broadcast %cst_45 : f32 to vector<6x1xf32>
    %126 = arith.divf %124, %125 : vector<6x1xf32>
    %cst_46 = arith.constant 9.99999974E-6 : f32
    %127 = vector.broadcast %cst_46 : f32 to vector<6x1xf32>
    %128 = arith.addf %126, %127 : vector<6x1xf32>
    %129 = math.rsqrt %128 : vector<6x1xf32>
    %130 = vector.broadcast %129 : vector<6x1xf32> to vector<6x48xf32>
    %131 = arith.mulf %121, %130 : vector<6x48xf32>
    %132 = vector.broadcast %14 : vector<1x48xf32> to vector<6x48xf32>
    %133 = arith.mulf %131, %132 : vector<6x48xf32>
    %134 = vector.broadcast %15 : vector<1x48xf32> to vector<6x48xf32>
    %135 = arith.addf %133, %134 : vector<6x48xf32>
    %136 = arith.truncf %135 : vector<6x48xf32> to vector<6x48xbf16>
    %c0_47 = arith.constant 0 : index
    %c0_48 = arith.constant 0 : index
    %c0_49 = arith.constant 0 : index
    %137 = vector.load %arg10[%c0_47, %c0_48, %c0_49] : memref<2x48x192xbf16, #tpu.memory_space<vmem>>, vector<1x48x192xbf16>
    %138 = vector.shape_cast %137 : vector<1x48x192xbf16> to vector<48x192xbf16>
    %cst_50 = arith.constant dense<0.000000e+00> : vector<6x192xf32>
    %139 = tpu.matmul %136, %138, %cst_50 {dimension_numbers = #tpu.dot_dimension_numbers<[1], [0], [0], [1], [0, 0, 1, 1], [], []>} : vector<6x48xbf16>, vector<48x192xbf16>, vector<6x192xf32> -> vector<6x192xf32>
    %140 = vector.broadcast %16 : vector<1x192xf32> to vector<6x192xf32>
    %141 = arith.addf %139, %140 : vector<6x192xf32>
    %cst_51 = arith.constant 5.000000e-01 : f32
    %142 = vector.broadcast %cst_51 : f32 to vector<6x192xf32>
    %143 = arith.mulf %142, %141 : vector<6x192xf32>
    %cst_52 = arith.constant 0.707106769 : f32
    %144 = vector.broadcast %cst_52 : f32 to vector<6x192xf32>
    %145 = arith.mulf %141, %144 : vector<6x192xf32>
    %146 = math.erf %145 : vector<6x192xf32>
    %cst_53 = arith.constant 1.000000e+00 : f32
    %147 = vector.broadcast %cst_53 : f32 to vector<6x192xf32>
    %148 = arith.addf %147, %146 : vector<6x192xf32>
    %149 = arith.mulf %143, %148 : vector<6x192xf32>
    %150 = arith.truncf %149 : vector<6x192xf32> to vector<6x192xbf16>
    %c0_54 = arith.constant 0 : index
    %c0_55 = arith.constant 0 : index
    %c0_56 = arith.constant 0 : index
    %151 = vector.load %arg11[%c0_54, %c0_55, %c0_56] : memref<2x192x48xbf16, #tpu.memory_space<vmem>>, vector<1x192x48xbf16>
    %152 = vector.shape_cast %151 : vector<1x192x48xbf16> to vector<192x48xbf16>
    %cst_57 = arith.constant dense<0.000000e+00> : vector<6x48xf32>
    %153 = tpu.matmul %150, %152, %cst_57 {dimension_numbers = #tpu.dot_dimension_numbers<[1], [0], [0], [1], [0, 0, 1, 1], [], []>} : vector<6x192xbf16>, vector<192x48xbf16>, vector<6x48xf32> -> vector<6x48xf32>
    %154 = vector.broadcast %17 : vector<1x48xf32> to vector<6x48xf32>
    %155 = arith.addf %153, %154 : vector<6x48xf32>
    %156 = arith.addf %115, %155 : vector<6x48xf32>
    %157 = vector.extract_strided_slice %10 {offsets = [7, 0], sizes = [1, 48], strides = [1, 1]} : vector<16x192xf32> to vector<1x48xf32>
    %158 = vector.extract_strided_slice %10 {offsets = [8, 0], sizes = [1, 48], strides = [1, 1]} : vector<16x192xf32> to vector<1x48xf32>
    %159 = vector.extract_strided_slice %10 {offsets = [9, 0], sizes = [1, 48], strides = [1, 1]} : vector<16x192xf32> to vector<1x48xf32>
    %160 = vector.extract_strided_slice %10 {offsets = [10, 0], sizes = [1, 48], strides = [1, 1]} : vector<16x192xf32> to vector<1x48xf32>
    %161 = vector.extract_strided_slice %10 {offsets = [11, 0], sizes = [1, 48], strides = [1, 1]} : vector<16x192xf32> to vector<1x48xf32>
    %162 = vector.extract_strided_slice %10 {offsets = [12, 0], sizes = [1, 192], strides = [1, 1]} : vector<16x192xf32> to vector<1x192xf32>
    %163 = vector.extract_strided_slice %10 {offsets = [13, 0], sizes = [1, 48], strides = [1, 1]} : vector<16x192xf32> to vector<1x48xf32>
    %cst_58 = arith.constant dense<0.000000e+00> : vector<6xf32>
    %164 = vector.multi_reduction <add>, %156, %cst_58 [1] : vector<6x48xf32> to vector<6xf32>
    %165 = vector.shape_cast %164 : vector<6xf32> to vector<6x1xf32>
    %cst_59 = arith.constant 4.800000e+01 : f32
    %166 = vector.broadcast %cst_59 : f32 to vector<6x1xf32>
    %167 = arith.divf %165, %166 : vector<6x1xf32>
    %168 = vector.broadcast %167 : vector<6x1xf32> to vector<6x48xf32>
    %169 = arith.subf %156, %168 : vector<6x48xf32>
    %170 = arith.mulf %169, %169 : vector<6x48xf32>
    %cst_60 = arith.constant dense<0.000000e+00> : vector<6xf32>
    %171 = vector.multi_reduction <add>, %170, %cst_60 [1] : vector<6x48xf32> to vector<6xf32>
    %172 = vector.shape_cast %171 : vector<6xf32> to vector<6x1xf32>
    %cst_61 = arith.constant 4.800000e+01 : f32
    %173 = vector.broadcast %cst_61 : f32 to vector<6x1xf32>
    %174 = arith.divf %172, %173 : vector<6x1xf32>
    %cst_62 = arith.constant 9.99999974E-6 : f32
    %175 = vector.broadcast %cst_62 : f32 to vector<6x1xf32>
    %176 = arith.addf %174, %175 : vector<6x1xf32>
    %177 = math.rsqrt %176 : vector<6x1xf32>
    %178 = vector.broadcast %177 : vector<6x1xf32> to vector<6x48xf32>
    %179 = arith.mulf %169, %178 : vector<6x48xf32>
    %180 = vector.broadcast %157 : vector<1x48xf32> to vector<6x48xf32>
    %181 = arith.mulf %179, %180 : vector<6x48xf32>
    %182 = vector.broadcast %158 : vector<1x48xf32> to vector<6x48xf32>
    %183 = arith.addf %181, %182 : vector<6x48xf32>
    %184 = arith.truncf %183 : vector<6x48xf32> to vector<6x48xbf16>
    %c1 = arith.constant 1 : index
    %c0_63 = arith.constant 0 : index
    %c0_64 = arith.constant 0 : index
    %185 = vector.load %arg8[%c1, %c0_63, %c0_64] : memref<2x48x144xbf16, #tpu.memory_space<vmem>>, vector<1x48x144xbf16>
    %186 = vector.shape_cast %185 : vector<1x48x144xbf16> to vector<48x144xbf16>
    %cst_65 = arith.constant dense<0.000000e+00> : vector<6x144xf32>
    %187 = tpu.matmul %184, %186, %cst_65 {dimension_numbers = #tpu.dot_dimension_numbers<[1], [0], [0], [1], [0, 0, 1, 1], [], []>} : vector<6x48xbf16>, vector<48x144xbf16>, vector<6x144xf32> -> vector<6x144xf32>
    %188 = vector.extract_strided_slice %187 {offsets = [0, 0], sizes = [6, 16], strides = [1, 1]} : vector<6x144xf32> to vector<6x16xf32>
    %189 = arith.truncf %188 : vector<6x16xf32> to vector<6x16xbf16>
    %190 = vector.extract_strided_slice %187 {offsets = [0, 16], sizes = [6, 16], strides = [1, 1]} : vector<6x144xf32> to vector<6x16xf32>
    %191 = arith.truncf %190 : vector<6x16xf32> to vector<6x16xbf16>
    %192 = vector.extract_strided_slice %187 {offsets = [0, 32], sizes = [6, 16], strides = [1, 1]} : vector<6x144xf32> to vector<6x16xf32>
    %193 = arith.truncf %192 : vector<6x16xf32> to vector<6x16xbf16>
    %cst_66 = arith.constant dense<0.000000e+00> : vector<6x6xf32>
    %194 = tpu.matmul %189, %191, %cst_66 {dimension_numbers = #tpu.dot_dimension_numbers<[1], [1], [0], [0], [0, 0, 1, 0], [], []>} : vector<6x16xbf16>, vector<6x16xbf16>, vector<6x6xf32> -> vector<6x6xf32>
    %cst_67 = arith.constant 2.500000e-01 : f32
    %195 = vector.broadcast %cst_67 : f32 to vector<6x6xf32>
    %196 = arith.mulf %194, %195 : vector<6x6xf32>
    %197 = arith.addf %196, %9 : vector<6x6xf32>
    %cst_68 = arith.constant dense<0xFF800000> : vector<6xf32>
    %198 = vector.multi_reduction <maximumf>, %197, %cst_68 [1] : vector<6x6xf32> to vector<6xf32>
    %199 = vector.shape_cast %198 : vector<6xf32> to vector<6x1xf32>
    %200 = vector.broadcast %199 : vector<6x1xf32> to vector<6x6xf32>
    %201 = arith.subf %197, %200 : vector<6x6xf32>
    %202 = math.exp %201 : vector<6x6xf32>
    %cst_69 = arith.constant dense<0.000000e+00> : vector<6xf32>
    %203 = vector.multi_reduction <add>, %202, %cst_69 [1] : vector<6x6xf32> to vector<6xf32>
    %204 = vector.shape_cast %203 : vector<6xf32> to vector<6x1xf32>
    %205 = tpu.reciprocal %204 {approx = true} : vector<6x1xf32> -> vector<6x1xf32>
    %206 = vector.broadcast %205 : vector<6x1xf32> to vector<6x6xf32>
    %207 = arith.mulf %202, %206 : vector<6x6xf32>
    %208 = arith.truncf %207 : vector<6x6xf32> to vector<6x6xbf16>
    %cst_70 = arith.constant dense<0.000000e+00> : vector<6x16xf32>
    %209 = tpu.matmul %208, %193, %cst_70 {dimension_numbers = #tpu.dot_dimension_numbers<[1], [0], [0], [1], [0, 0, 1, 1], [], []>} : vector<6x6xbf16>, vector<6x16xbf16>, vector<6x16xf32> -> vector<6x16xf32>
    %210 = vector.extract_strided_slice %187 {offsets = [0, 48], sizes = [6, 16], strides = [1, 1]} : vector<6x144xf32> to vector<6x16xf32>
    %211 = arith.truncf %210 : vector<6x16xf32> to vector<6x16xbf16>
    %212 = vector.extract_strided_slice %187 {offsets = [0, 64], sizes = [6, 16], strides = [1, 1]} : vector<6x144xf32> to vector<6x16xf32>
    %213 = arith.truncf %212 : vector<6x16xf32> to vector<6x16xbf16>
    %214 = vector.extract_strided_slice %187 {offsets = [0, 80], sizes = [6, 16], strides = [1, 1]} : vector<6x144xf32> to vector<6x16xf32>
    %215 = arith.truncf %214 : vector<6x16xf32> to vector<6x16xbf16>
    %cst_71 = arith.constant dense<0.000000e+00> : vector<6x6xf32>
    %216 = tpu.matmul %211, %213, %cst_71 {dimension_numbers = #tpu.dot_dimension_numbers<[1], [1], [0], [0], [0, 0, 1, 0], [], []>} : vector<6x16xbf16>, vector<6x16xbf16>, vector<6x6xf32> -> vector<6x6xf32>
    %cst_72 = arith.constant 2.500000e-01 : f32
    %217 = vector.broadcast %cst_72 : f32 to vector<6x6xf32>
    %218 = arith.mulf %216, %217 : vector<6x6xf32>
    %219 = arith.addf %218, %9 : vector<6x6xf32>
    %cst_73 = arith.constant dense<0xFF800000> : vector<6xf32>
    %220 = vector.multi_reduction <maximumf>, %219, %cst_73 [1] : vector<6x6xf32> to vector<6xf32>
    %221 = vector.shape_cast %220 : vector<6xf32> to vector<6x1xf32>
    %222 = vector.broadcast %221 : vector<6x1xf32> to vector<6x6xf32>
    %223 = arith.subf %219, %222 : vector<6x6xf32>
    %224 = math.exp %223 : vector<6x6xf32>
    %cst_74 = arith.constant dense<0.000000e+00> : vector<6xf32>
    %225 = vector.multi_reduction <add>, %224, %cst_74 [1] : vector<6x6xf32> to vector<6xf32>
    %226 = vector.shape_cast %225 : vector<6xf32> to vector<6x1xf32>
    %227 = tpu.reciprocal %226 {approx = true} : vector<6x1xf32> -> vector<6x1xf32>
    %228 = vector.broadcast %227 : vector<6x1xf32> to vector<6x6xf32>
    %229 = arith.mulf %224, %228 : vector<6x6xf32>
    %230 = arith.truncf %229 : vector<6x6xf32> to vector<6x6xbf16>
    %cst_75 = arith.constant dense<0.000000e+00> : vector<6x16xf32>
    %231 = tpu.matmul %230, %215, %cst_75 {dimension_numbers = #tpu.dot_dimension_numbers<[1], [0], [0], [1], [0, 0, 1, 1], [], []>} : vector<6x6xbf16>, vector<6x16xbf16>, vector<6x16xf32> -> vector<6x16xf32>
    %232 = vector.extract_strided_slice %187 {offsets = [0, 96], sizes = [6, 16], strides = [1, 1]} : vector<6x144xf32> to vector<6x16xf32>
    %233 = arith.truncf %232 : vector<6x16xf32> to vector<6x16xbf16>
    %234 = vector.extract_strided_slice %187 {offsets = [0, 112], sizes = [6, 16], strides = [1, 1]} : vector<6x144xf32> to vector<6x16xf32>
    %235 = arith.truncf %234 : vector<6x16xf32> to vector<6x16xbf16>
    %236 = vector.extract_strided_slice %187 {offsets = [0, 128], sizes = [6, 16], strides = [1, 1]} : vector<6x144xf32> to vector<6x16xf32>
    %237 = arith.truncf %236 : vector<6x16xf32> to vector<6x16xbf16>
    %cst_76 = arith.constant dense<0.000000e+00> : vector<6x6xf32>
    %238 = tpu.matmul %233, %235, %cst_76 {dimension_numbers = #tpu.dot_dimension_numbers<[1], [1], [0], [0], [0, 0, 1, 0], [], []>} : vector<6x16xbf16>, vector<6x16xbf16>, vector<6x6xf32> -> vector<6x6xf32>
    %cst_77 = arith.constant 2.500000e-01 : f32
    %239 = vector.broadcast %cst_77 : f32 to vector<6x6xf32>
    %240 = arith.mulf %238, %239 : vector<6x6xf32>
    %241 = arith.addf %240, %9 : vector<6x6xf32>
    %cst_78 = arith.constant dense<0xFF800000> : vector<6xf32>
    %242 = vector.multi_reduction <maximumf>, %241, %cst_78 [1] : vector<6x6xf32> to vector<6xf32>
    %243 = vector.shape_cast %242 : vector<6xf32> to vector<6x1xf32>
    %244 = vector.broadcast %243 : vector<6x1xf32> to vector<6x6xf32>
    %245 = arith.subf %241, %244 : vector<6x6xf32>
    %246 = math.exp %245 : vector<6x6xf32>
    %cst_79 = arith.constant dense<0.000000e+00> : vector<6xf32>
    %247 = vector.multi_reduction <add>, %246, %cst_79 [1] : vector<6x6xf32> to vector<6xf32>
    %248 = vector.shape_cast %247 : vector<6xf32> to vector<6x1xf32>
    %249 = tpu.reciprocal %248 {approx = true} : vector<6x1xf32> -> vector<6x1xf32>
    %250 = vector.broadcast %249 : vector<6x1xf32> to vector<6x6xf32>
    %251 = arith.mulf %246, %250 : vector<6x6xf32>
    %252 = arith.truncf %251 : vector<6x6xf32> to vector<6x6xbf16>
    %cst_80 = arith.constant dense<0.000000e+00> : vector<6x16xf32>
    %253 = tpu.matmul %252, %237, %cst_80 {dimension_numbers = #tpu.dot_dimension_numbers<[1], [0], [0], [1], [0, 0, 1, 1], [], []>} : vector<6x6xbf16>, vector<6x16xbf16>, vector<6x16xf32> -> vector<6x16xf32>
    %254 = tpu.concatenate %209, %231, %253 in 1 : vector<6x16xf32>, vector<6x16xf32>, vector<6x16xf32> -> vector<6x48xf32>
    %255 = arith.truncf %254 : vector<6x48xf32> to vector<6x48xbf16>
    %c1_81 = arith.constant 1 : index
    %c0_82 = arith.constant 0 : index
    %c0_83 = arith.constant 0 : index
    %256 = vector.load %arg9[%c1_81, %c0_82, %c0_83] : memref<2x48x48xbf16, #tpu.memory_space<vmem>>, vector<1x48x48xbf16>
    %257 = vector.shape_cast %256 : vector<1x48x48xbf16> to vector<48x48xbf16>
    %cst_84 = arith.constant dense<0.000000e+00> : vector<6x48xf32>
    %258 = tpu.matmul %255, %257, %cst_84 {dimension_numbers = #tpu.dot_dimension_numbers<[1], [0], [0], [1], [0, 0, 1, 1], [], []>} : vector<6x48xbf16>, vector<48x48xbf16>, vector<6x48xf32> -> vector<6x48xf32>
    %259 = vector.broadcast %159 : vector<1x48xf32> to vector<6x48xf32>
    %260 = arith.addf %258, %259 : vector<6x48xf32>
    %261 = arith.addf %156, %260 : vector<6x48xf32>
    %cst_85 = arith.constant dense<0.000000e+00> : vector<6xf32>
    %262 = vector.multi_reduction <add>, %261, %cst_85 [1] : vector<6x48xf32> to vector<6xf32>
    %263 = vector.shape_cast %262 : vector<6xf32> to vector<6x1xf32>
    %cst_86 = arith.constant 4.800000e+01 : f32
    %264 = vector.broadcast %cst_86 : f32 to vector<6x1xf32>
    %265 = arith.divf %263, %264 : vector<6x1xf32>
    %266 = vector.broadcast %265 : vector<6x1xf32> to vector<6x48xf32>
    %267 = arith.subf %261, %266 : vector<6x48xf32>
    %268 = arith.mulf %267, %267 : vector<6x48xf32>
    %cst_87 = arith.constant dense<0.000000e+00> : vector<6xf32>
    %269 = vector.multi_reduction <add>, %268, %cst_87 [1] : vector<6x48xf32> to vector<6xf32>
    %270 = vector.shape_cast %269 : vector<6xf32> to vector<6x1xf32>
    %cst_88 = arith.constant 4.800000e+01 : f32
    %271 = vector.broadcast %cst_88 : f32 to vector<6x1xf32>
    %272 = arith.divf %270, %271 : vector<6x1xf32>
    %cst_89 = arith.constant 9.99999974E-6 : f32
    %273 = vector.broadcast %cst_89 : f32 to vector<6x1xf32>
    %274 = arith.addf %272, %273 : vector<6x1xf32>
    %275 = math.rsqrt %274 : vector<6x1xf32>
    %276 = vector.broadcast %275 : vector<6x1xf32> to vector<6x48xf32>
    %277 = arith.mulf %267, %276 : vector<6x48xf32>
    %278 = vector.broadcast %160 : vector<1x48xf32> to vector<6x48xf32>
    %279 = arith.mulf %277, %278 : vector<6x48xf32>
    %280 = vector.broadcast %161 : vector<1x48xf32> to vector<6x48xf32>
    %281 = arith.addf %279, %280 : vector<6x48xf32>
    %282 = arith.truncf %281 : vector<6x48xf32> to vector<6x48xbf16>
    %c1_90 = arith.constant 1 : index
    %c0_91 = arith.constant 0 : index
    %c0_92 = arith.constant 0 : index
    %283 = vector.load %arg10[%c1_90, %c0_91, %c0_92] : memref<2x48x192xbf16, #tpu.memory_space<vmem>>, vector<1x48x192xbf16>
    %284 = vector.shape_cast %283 : vector<1x48x192xbf16> to vector<48x192xbf16>
    %cst_93 = arith.constant dense<0.000000e+00> : vector<6x192xf32>
    %285 = tpu.matmul %282, %284, %cst_93 {dimension_numbers = #tpu.dot_dimension_numbers<[1], [0], [0], [1], [0, 0, 1, 1], [], []>} : vector<6x48xbf16>, vector<48x192xbf16>, vector<6x192xf32> -> vector<6x192xf32>
    %286 = vector.broadcast %162 : vector<1x192xf32> to vector<6x192xf32>
    %287 = arith.addf %285, %286 : vector<6x192xf32>
    %cst_94 = arith.constant 5.000000e-01 : f32
    %288 = vector.broadcast %cst_94 : f32 to vector<6x192xf32>
    %289 = arith.mulf %288, %287 : vector<6x192xf32>
    %cst_95 = arith.constant 0.707106769 : f32
    %290 = vector.broadcast %cst_95 : f32 to vector<6x192xf32>
    %291 = arith.mulf %287, %290 : vector<6x192xf32>
    %292 = math.erf %291 : vector<6x192xf32>
    %cst_96 = arith.constant 1.000000e+00 : f32
    %293 = vector.broadcast %cst_96 : f32 to vector<6x192xf32>
    %294 = arith.addf %293, %292 : vector<6x192xf32>
    %295 = arith.mulf %289, %294 : vector<6x192xf32>
    %296 = arith.truncf %295 : vector<6x192xf32> to vector<6x192xbf16>
    %c1_97 = arith.constant 1 : index
    %c0_98 = arith.constant 0 : index
    %c0_99 = arith.constant 0 : index
    %297 = vector.load %arg11[%c1_97, %c0_98, %c0_99] : memref<2x192x48xbf16, #tpu.memory_space<vmem>>, vector<1x192x48xbf16>
    %298 = vector.shape_cast %297 : vector<1x192x48xbf16> to vector<192x48xbf16>
    %cst_100 = arith.constant dense<0.000000e+00> : vector<6x48xf32>
    %299 = tpu.matmul %296, %298, %cst_100 {dimension_numbers = #tpu.dot_dimension_numbers<[1], [0], [0], [1], [0, 0, 1, 1], [], []>} : vector<6x192xbf16>, vector<192x48xbf16>, vector<6x48xf32> -> vector<6x48xf32>
    %300 = vector.broadcast %163 : vector<1x48xf32> to vector<6x48xf32>
    %301 = arith.addf %299, %300 : vector<6x48xf32>
    %302 = arith.addf %261, %301 : vector<6x48xf32>
    %303 = vector.extract_strided_slice %10 {offsets = [14, 0], sizes = [1, 48], strides = [1, 1]} : vector<16x192xf32> to vector<1x48xf32>
    %304 = vector.extract_strided_slice %10 {offsets = [15, 0], sizes = [1, 48], strides = [1, 1]} : vector<16x192xf32> to vector<1x48xf32>
    %cst_101 = arith.constant dense<0.000000e+00> : vector<6xf32>
    %305 = vector.multi_reduction <add>, %302, %cst_101 [1] : vector<6x48xf32> to vector<6xf32>
    %306 = vector.shape_cast %305 : vector<6xf32> to vector<6x1xf32>
    %cst_102 = arith.constant 4.800000e+01 : f32
    %307 = vector.broadcast %cst_102 : f32 to vector<6x1xf32>
    %308 = arith.divf %306, %307 : vector<6x1xf32>
    %309 = vector.broadcast %308 : vector<6x1xf32> to vector<6x48xf32>
    %310 = arith.subf %302, %309 : vector<6x48xf32>
    %311 = arith.mulf %310, %310 : vector<6x48xf32>
    %cst_103 = arith.constant dense<0.000000e+00> : vector<6xf32>
    %312 = vector.multi_reduction <add>, %311, %cst_103 [1] : vector<6x48xf32> to vector<6xf32>
    %313 = vector.shape_cast %312 : vector<6xf32> to vector<6x1xf32>
    %cst_104 = arith.constant 4.800000e+01 : f32
    %314 = vector.broadcast %cst_104 : f32 to vector<6x1xf32>
    %315 = arith.divf %313, %314 : vector<6x1xf32>
    %cst_105 = arith.constant 9.99999974E-6 : f32
    %316 = vector.broadcast %cst_105 : f32 to vector<6x1xf32>
    %317 = arith.addf %315, %316 : vector<6x1xf32>
    %318 = math.rsqrt %317 : vector<6x1xf32>
    %319 = vector.broadcast %318 : vector<6x1xf32> to vector<6x48xf32>
    %320 = arith.mulf %310, %319 : vector<6x48xf32>
    %321 = vector.broadcast %303 : vector<1x48xf32> to vector<6x48xf32>
    %322 = arith.mulf %320, %321 : vector<6x48xf32>
    %323 = vector.broadcast %304 : vector<1x48xf32> to vector<6x48xf32>
    %324 = arith.addf %322, %323 : vector<6x48xf32>
    %c0_106 = arith.constant 0 : index
    %c0_107 = arith.constant 0 : index
    %325 = vector.load %arg12[%c0_106, %c0_107] : memref<6x48xf32, #tpu.memory_space<vmem>>, vector<6x48xf32>
    tpu.vector_store %arg12[%c0_106, %c0_107], %324 {strides = array<i32>} : memref<6x48xf32, #tpu.memory_space<vmem>>, vector<6x48xf32>,
    return
  }
  func.func @transform_0(%arg0: i32) -> (i32, i32) {
    %c0_i32 = arith.constant 0 : i32
    %c0_i32_0 = arith.constant 0 : i32
    %c0_i32_1 = arith.constant 0 : i32
    return %c0_i32, %c0_i32_0 : i32, i32
  }
  func.func @transform_1(%arg0: i32) -> (i32, i32) {
    %c0_i32 = arith.constant 0 : i32
    %c0_i32_0 = arith.constant 0 : i32
    %c0_i32_1 = arith.constant 0 : i32
    return %c0_i32, %c0_i32_0 : i32, i32
  }
  func.func @transform_2(%arg0: i32) -> (i32, i32) {
    %c0_i32 = arith.constant 0 : i32
    %c0_i32_0 = arith.constant 0 : i32
    %c0_i32_1 = arith.constant 0 : i32
    return %c0_i32, %c0_i32_0 : i32, i32
  }
  func.func @transform_3(%arg0: i32) -> (i32, i32) {
    %c0_i32 = arith.constant 0 : i32
    %c0_i32_0 = arith.constant 0 : i32
    %c0_i32_1 = arith.constant 0 : i32
    return %c0_i32, %c0_i32_0 : i32, i32
  }
  func.func @transform_4(%arg0: i32) -> (i32, i32) {
    %c0_i32 = arith.constant 0 : i32
    %c0_i32_0 = arith.constant 0 : i32
    %c0_i32_1 = arith.constant 0 : i32
    return %c0_i32, %c0_i32_0 : i32, i32
  }
  func.func @transform_5(%arg0: i32) -> (i32, i32) {
    %c0_i32 = arith.constant 0 : i32
    %c0_i32_0 = arith.constant 0 : i32
    %c0_i32_1 = arith.constant 0 : i32
    return %c0_i32, %c0_i32_0 : i32, i32
  }
  func.func @transform_6(%arg0: i32) -> (i32, i32) {
    %c0_i32 = arith.constant 0 : i32
    %c0_i32_0 = arith.constant 0 : i32
    %c0_i32_1 = arith.constant 0 : i32
    return %c0_i32, %c0_i32_0 : i32, i32
  }
  func.func @transform_7(%arg0: i32) -> (i32, i32, i32) {
    %c0_i32 = arith.constant 0 : i32
    %c0_i32_0 = arith.constant 0 : i32
    %c0_i32_1 = arith.constant 0 : i32
    %c0_i32_2 = arith.constant 0 : i32
    return %c0_i32, %c0_i32_0, %c0_i32_1 : i32, i32, i32
  }
  func.func @transform_8(%arg0: i32) -> (i32, i32, i32) {
    %c0_i32 = arith.constant 0 : i32
    %c0_i32_0 = arith.constant 0 : i32
    %c0_i32_1 = arith.constant 0 : i32
    %c0_i32_2 = arith.constant 0 : i32
    return %c0_i32, %c0_i32_0, %c0_i32_1 : i32, i32, i32
  }
  func.func @transform_9(%arg0: i32) -> (i32, i32, i32) {
    %c0_i32 = arith.constant 0 : i32
    %c0_i32_0 = arith.constant 0 : i32
    %c0_i32_1 = arith.constant 0 : i32
    %c0_i32_2 = arith.constant 0 : i32
    return %c0_i32, %c0_i32_0, %c0_i32_1 : i32, i32, i32
  }
  func.func @transform_10(%arg0: i32) -> (i32, i32, i32) {
    %c0_i32 = arith.constant 0 : i32
    %c0_i32_0 = arith.constant 0 : i32
    %c0_i32_1 = arith.constant 0 : i32
    %c0_i32_2 = arith.constant 0 : i32
    return %c0_i32, %c0_i32_0, %c0_i32_1 : i32, i32, i32
  }
  func.func @transform_11(%arg0: i32) -> (i32, i32) {
    %c0_i32 = arith.constant 0 : i32
    %c0_i32_0 = arith.constant 0 : i32
    %c0_i32_1 = arith.constant 0 : i32
    return %c0_i32, %c0_i32_0 : i32, i32
  }
}

</mosaic_0001>

<llo_original>
// kernel: _forward_jit.1
$region0: #{_forward_jit.1}
  #allocation0 [shape = 'u32[]', space=smem, size = 0x4, offset = 0x4, fixed_abs, tag = 'smem constant byte address 0x4 - core index']
  #allocation1 [shape = 'u32[144,128]{1,0:T(1,128)}', space=vmem, size = 0x12000, scoped, tag = 'internal scratch']
  %s0 = inlined_call_operand.vmem [shape: bf16[16,4], index: 0, kind: input, shape index: {}]
  %s1 = inlined_call_operand.vmem [shape: bf16[4,48], index: 1, kind: input, shape index: {}]
  %s2 = inlined_call_operand.vmem [shape: f32[16,48], index: 2, kind: input, shape index: {}]
  %s3 = inlined_call_operand.vmem [shape: f32[6,16], index: 3, kind: input, shape index: {}]
  %s4 = inlined_call_operand.vmem [shape: f32[6,48], index: 4, kind: input, shape index: {}]
  %s5 = inlined_call_operand.vmem [shape: f32[6,6], index: 5, kind: input, shape index: {}]
  %s6 = inlined_call_operand.vmem [shape: f32[16,192], index: 6, kind: input, shape index: {}]
  %s7 = inlined_call_operand.vmem [shape: bf16[2,48,144], index: 7, kind: input, shape index: {}]
  %s8 = inlined_call_operand.vmem [shape: bf16[2,48,48], index: 8, kind: input, shape index: {}]
  %s9 = inlined_call_operand.vmem [shape: bf16[2,48,192], index: 9, kind: input, shape index: {}]
  %s10 = inlined_call_operand.vmem [shape: bf16[2,192,48], index: 10, kind: input, shape index: {}]
  %s11 = inlined_call_operand.vmem [shape: f32[6,48], index: 11, kind: output, shape index: {}]
  %s12 = sld [smem:[#allocation0]]
  $region54: #{_forward_jit.1} parent=0
    _
  %s14 = ssub.s32 1, %s12
  %s15 = scalar_select 0, %s14, %s12
  // Predicated region
  $region2: #{_forward_jit.1} parent=0 // pred_check
    _
  $region3: #{_forward_jit.1} parent=0 // pred_check_branch
    %17 = sbr.rel (0) target = $region5
  $region4: #{_forward_jit.1} parent=0 // pred_region
    _
  $region5: #{_forward_jit.1} parent=0 // pred_fallthru
    _
  // Predicated region
  $region6: #{_forward_jit.1} parent=0 // pred_check
    _
  $region7: #{_forward_jit.1} parent=0 // pred_check_branch
    %19 = sbr.rel (0) target = $region9
  $region8: #{_forward_jit.1} parent=0 // pred_region
    _
  $region9: #{_forward_jit.1} parent=0 // pred_fallthru
    _
  // Predicated region
  $region10: #{_forward_jit.1} parent=0 // pred_check
    _
  $region11: #{_forward_jit.1} parent=0 // pred_check_branch
    %21 = sbr.rel (0) target = $region13
  $region12: #{_forward_jit.1} parent=0 // pred_region
    _
  $region13: #{_forward_jit.1} parent=0 // pred_fallthru
    _
  // Predicated region
  $region14: #{_forward_jit.1} parent=0 // pred_check
    _
  $region15: #{_forward_jit.1} parent=0 // pred_check_branch
    %23 = sbr.rel (0) target = $region17
  $region16: #{_forward_jit.1} parent=0 // pred_region
    _
  $region17: #{_forward_jit.1} parent=0 // pred_fallthru
    _
  // Predicated region
  $region18: #{_forward_jit.1} parent=0 // pred_check
    _
  $region19: #{_forward_jit.1} parent=0 // pred_check_branch
    %25 = sbr.rel (0) target = $region21
  $region20: #{_forward_jit.1} parent=0 // pred_region
    _
  $region21: #{_forward_jit.1} parent=0 // pred_fallthru
    _
  // Predicated region
  $region22: #{_forward_jit.1} parent=0 // pred_check
    _
  $region23: #{_forward_jit.1} parent=0 // pred_check_branch
    %27 = sbr.rel (0) target = $region25
  $region24: #{_forward_jit.1} parent=0 // pred_region
    _
  $region25: #{_forward_jit.1} parent=0 // pred_fallthru
    _
  // Predicated region
  $region26: #{_forward_jit.1} parent=0 // pred_check
    _
  $region27: #{_forward_jit.1} parent=0 // pred_check_branch
    %29 = sbr.rel (0) target = $region29
  $region28: #{_forward_jit.1} parent=0 // pred_region
    _
  $region29: #{_forward_jit.1} parent=0 // pred_fallthru
    _
  // Predicated region
  $region30: #{_forward_jit.1} parent=0 // pred_check
    _
  $region31: #{_forward_jit.1} parent=0 // pred_check_branch
    %31 = sbr.rel (0) target = $region33
  $region32: #{_forward_jit.1} parent=0 // pred_region
    _
  $region33: #{_forward_jit.1} parent=0 // pred_fallthru
    _
  // Predicated region
  $region34: #{_forward_jit.1} parent=0 // pred_check
    _
  $region35: #{_forward_jit.1} parent=0 // pred_check_branch
    %33 = sbr.rel (0) target = $region37
  $region36: #{_forward_jit.1} parent=0 // pred_region
    _
  $region37: #{_forward_jit.1} parent=0 // pred_fallthru
    _
  // Predicated region
  $region38: #{_forward_jit.1} parent=0 // pred_check
    _
  $region39: #{_forward_jit.1} parent=0 // pred_check_branch
    %35 = sbr.rel (0) target = $region41
  $region40: #{_forward_jit.1} parent=0 // pred_region
    _
  $region41: #{_forward_jit.1} parent=0 // pred_fallthru
    _
  // Predicated region
  $region42: #{_forward_jit.1} parent=0 // pred_check
    _
  $region43: #{_forward_jit.1} parent=0 // pred_check_branch
    %37 = sbr.rel (0) target = $region45
  $region44: #{_forward_jit.1} parent=0 // pred_region
    _
  $region45: #{_forward_jit.1} parent=0 // pred_fallthru
    _
  %v39 = vld [vmem:[%s0] sm:$0xf]
  %v40 = vld [vmem:[%s0 + $0x4] sm:$0xf]
  %v41 = vld [vmem:[%s1] sm:$0x3]
  %v42 = vld [vmem:[%s2] sm:$0xff]
  %v43 = vld [vmem:[%s2 + $0x8] sm:$0xff]
  %v46 = vunpack.c.l.b16 %v39
  %v47 = vunpack.c.l.b16 %v40
  %v48 = vpack.c.b16 %v47, %v46
  %vm49 = vcmask 31744
  %v51 = vsel %vm49, %v48, 0
  %vm53 = vcmask 1041408
  %v55 = vsel %vm53, %v41, 0
  %57 = vmatprep.subr.bf16.mxu0 0
  %58 = vmatpush1.bf16.msra.mxu0 %v55
  %59 = vmatprep.subr.bf16.mxu0 0
  %60 = vmatpush1.bf16.msra.mxu0 0
  %61 = vmatprep.subr.bf16.mxu0 0
  %62 = vmatpush1.bf16.msra.mxu0 0
  %63 = vmatprep.subr.bf16.mxu0 0
  %64 = vmatpush1.bf16.msra.mxu0 0
  %65 = vmatprep.subr.bf16.mxu0 0
  %66 = vmatpush1.bf16.msra.mxu0 0
  %67 = vmatprep.subr.bf16.mxu0 0
  %68 = vmatpush1.bf16.msra.mxu0 0
  %69 = vmatprep.subr.bf16.mxu0 0
  %70 = vmatpush1.bf16.msra.mxu0 0
  %71 = vmatprep.subr.bf16.mxu0 0
  %72 = vmatpush1.bf16.msra.mxu0 0
  %73 = vmatprep.subr.bf16.mxu0 0
  %74 = vmatpush1.bf16.msra.mxu0 0
  %75 = vmatprep.subr.bf16.mxu0 0
  %76 = vmatpush1.bf16.msra.mxu0 0
  %77 = vmatprep.subr.bf16.mxu0 0
  %78 = vmatpush1.bf16.msra.mxu0 0
  %79 = vmatprep.subr.bf16.mxu0 0
  %80 = vmatpush1.bf16.msra.mxu0 0
  %81 = vmatprep.subr.bf16.mxu0 0
  %82 = vmatpush1.bf16.msra.mxu0 0
  %83 = vmatprep.subr.bf16.mxu0 0
  %84 = vmatpush1.bf16.msra.mxu0 0
  %85 = vmatprep.subr.bf16.mxu0 0
  %86 = vmatpush1.bf16.msra.mxu0 0
  %87 = vmatprep.subr.bf16.mxu0 0
  %88 = vmatpush1.bf16.msra.mxu0 0
  %89 = vmatprep.mubr.bf16.mxu0 0
  %90 = vmatmul.mubr.bf16.gmra.mrb[0].mxu0 %v51
  %v91 = vpop.f32.mrb[0].mxu0
  %v92 = vadd.f32 %v42, %v91
  %v93 = vpop.f32.mrb[0].mxu0
  %v94 = vpop.f32.mrb[0].mxu0
  %v95 = vadd.f32 %v43, %v94
  %v96 = vpop.f32.mrb[0].mxu0
  %97 = vdwg.mxu0
  %v98 = vld [vmem:[%s3] sm:$0x3f]
  %v99 = vld [vmem:[%s4] sm:$0x3f]
  %vm100 = vcmask 130048
  %v102 = vsel %vm100, %v98, 0
  %104 = vmatprep.subr.mxu0 0.0
  %105 = vmatpush1.msra.mxu0 %v92
  %106 = vmatprep.subr.mxu0 0.0
  %107 = vmatpush1.msra.mxu0 %v95
  %108 = vmatprep.subr.mxu0 0.0
  %109 = vmatpush1.msra.mxu0 0.0
  %110 = vmatprep.subr.mxu0 0.0
  %111 = vmatpush1.msra.mxu0 0.0
  %112 = vmatprep.subr.mxu0 0.0
  %113 = vmatpush1.msra.mxu0 0.0
  %114 = vmatprep.subr.mxu0 0.0
  %115 = vmatpush1.msra.mxu0 0.0
  %116 = vmatprep.subr.mxu0 0.0
  %117 = vmatpush1.msra.mxu0 0.0
  %118 = vmatprep.subr.mxu0 0.0
  %119 = vmatpush1.msra.mxu0 0.0
  %120 = vmatprep.subr.mxu0 0.0
  %121 = vmatpush1.msra.mxu0 0.0
  %122 = vmatprep.subr.mxu0 0.0
  %123 = vmatpush1.msra.mxu0 0.0
  %124 = vmatprep.subr.mxu0 0.0
  %125 = vmatpush1.msra.mxu0 0.0
  %126 = vmatprep.subr.mxu0 0.0
  %127 = vmatpush1.msra.mxu0 0.0
  %128 = vmatprep.subr.mxu0 0.0
  %129 = vmatpush1.msra.mxu0 0.0
  %130 = vmatprep.subr.mxu0 0.0
  %131 = vmatpush1.msra.mxu0 0.0
  %132 = vmatprep.subr.mxu0 0.0
  %133 = vmatpush1.msra.mxu0 0.0
  %134 = vmatprep.subr.mxu0 0.0
  %135 = vmatpush1.msra.mxu0 0.0
  %136 = vmatprep.subr.mxu0 0.0
  %137 = vmatpush1.msra.mxu0 0.0
  %138 = vmatprep.subr.mxu0 0.0
  %139 = vmatpush1.msra.mxu0 0.0
  %140 = vmatprep.subr.mxu0 0.0
  %141 = vmatpush1.msra.mxu0 0.0
  %142 = vmatprep.subr.mxu0 0.0
  %143 = vmatpush1.msra.mxu0 0.0
  %144 = vmatprep.subr.mxu0 0.0
  %145 = vmatpush1.msra.mxu0 0.0
  %146 = vmatprep.subr.mxu0 0.0
  %147 = vmatpush1.msra.mxu0 0.0
  %148 = vmatprep.subr.mxu0 0.0
  %149 = vmatpush1.msra.mxu0 0.0
  %150 = vmatprep.subr.mxu0 0.0
  %151 = vmatpush1.msra.mxu0 0.0
  %152 = vmatprep.subr.mxu0 0.0
  %153 = vmatpush1.msra.mxu0 0.0
  %154 = vmatprep.subr.mxu0 0.0
  %155 = vmatpush1.msra.mxu0 0.0
  %156 = vmatprep.subr.mxu0 0.0
  %157 = vmatpush1.msra.mxu0 0.0
  %158 = vmatprep.subr.mxu0 0.0
  %159 = vmatpush1.msra.mxu0 0.0
  %160 = vmatprep.subr.mxu0 0.0
  %161 = vmatpush1.msra.mxu0 0.0
  %162 = vmatprep.subr.mxu0 0.0
  %163 = vmatpush1.msra.mxu0 0.0
  %164 = vmatprep.subr.mxu0 0.0
  %165 = vmatpush1.msra.mxu0 0.0
  %166 = vmatprep.subr.mxu0 0.0
  %167 = vmatpush1.msra.mxu0 0.0
  %168 = vmatprep.mubr.f32.mxu0 0.0
  %169 = vmatmul.mubr.f32.gmra.mrb[0].mxu0 %v102
  %v170 = vpop.f32.mrb[0].mxu0
  %v171 = vadd.f32 %v99, %v170
  %v172 = vpop.f32.mrb[0].mxu0
  %173 = vdwg.mxu0
  %v174 = vld [vmem:[%s5] sm:$0x3f]
  %v175 = vld [vmem:[%s6] sm:$0xff]
  %v176 = vld [vmem:[%s6 + $0x8] sm:$0xff]
  %v177 = vld [vmem:[%s6 + $0x10] sm:$0xff]
  %v178 = vld [vmem:[%s6 + $0x18] sm:$0xff]
  %vm179 = vcmask 390144
  %v180 = vsel %vm179, %v171, 0.0
  %181 = vadd.xlane.f32.xlu0 %v180
  %v182 = vpop.xlane.xlu0 %181
  %v183 = vrcp.pop 48.0
  %v184 = vmul.f32 %v182, %v183
  %v185 = vsub.f32 %v171, %v184
  %v186 = vmul.f32 %v185, %v185
  %v187 = vsel %vm179, %v186, 0.0
  %188 = vadd.xlane.f32.xlu0 %v187
  %v189 = vpop.xlane.xlu0 %188
  %v190 = vmul.f32 %v189, %v183
  %v191 = vadd.f32 %v190, 1e-05
  %v192 = vrsqrt.pop %v191
  %v193 = vmul.f32 %v185, %v192
  %v194 = vlaneseq
  %v195 = vshrl.u32 %v194, 7
  %v196 = vsub.s32 0, %v195
  %v197 = vrot.slane %v175, %v196
  %v198 = vmul.f32 %v193, %v197
  %v199 = vlaneseq
  %v200 = vshrl.u32 %v199, 7
  %v201 = vsub.s32 1, %v200
  %v202 = vrot.slane %v175, %v201
  %v203 = vadd.f32 %v198, %v202
  %v204 = vpack.c.bf16 %v203, %v203
  %v205 = vld [vmem:[%s7] sm:$0xff]
  %v206 = vld [vmem:[%s7 + $0x8] sm:$0xff]
  %v207 = vld [vmem:[%s7 + $0x10] sm:$0xff]
  %v208 = vld [vmem:[%s7 + $0x18] sm:$0xff]
  %v209 = vld [vmem:[%s7 + $0x20] sm:$0xff]
  %v210 = vld [vmem:[%s7 + $0x28] sm:$0xff]
  %v217 = vunpack.c.l.b16 %v205
  %v218 = vunpack.c.h.b16 %v205
  %v219 = vunpack.c.l.b16 %v206
  %v220 = vunpack.c.h.b16 %v206
  %v221 = vunpack.c.l.b16 %v207
  %v222 = vunpack.c.h.b16 %v207
  %v223 = vunpack.c.l.b16 %v208
  %v224 = vunpack.c.h.b16 %v208
  %v225 = vunpack.c.l.b16 %v209
  %v226 = vunpack.c.h.b16 %v209
  %v227 = vunpack.c.l.b16 %v210
  %v228 = vunpack.c.h.b16 %v210
  %v229 = vpack.c.b16 %v219, %v217
  %v230 = vpack.c.b16 %v220, %v218
  %v231 = vpack.c.b16 %v223, %v221
  %v232 = vpack.c.b16 %v224, %v222
  %v233 = vpack.c.b16 %v227, %v225
  %v234 = vpack.c.b16 %v228, %v226
  %vm241 = vcmask 392192
  %v243 = vsel %vm241, %v204, 0
  %245 = vmatprep.subr.bf16.mxu0 %v230
  %246 = vmatpush1.bf16.msra.mxu0 %v229
  %247 = vmatprep.subr.bf16.mxu0 %v232
  %248 = vmatpush1.bf16.msra.mxu0 %v231
  %249 = vmatprep.subr.bf16.mxu0 %v234
  %250 = vmatpush1.bf16.msra.mxu0 %v233
  %251 = vmatprep.subr.bf16.mxu0 0
  %252 = vmatpush1.bf16.msra.mxu0 0
  %253 = vmatprep.subr.bf16.mxu0 0
  %254 = vmatpush1.bf16.msra.mxu0 0
  %255 = vmatprep.subr.bf16.mxu0 0
  %256 = vmatpush1.bf16.msra.mxu0 0
  %257 = vmatprep.subr.bf16.mxu0 0
  %258 = vmatpush1.bf16.msra.mxu0 0
  %259 = vmatprep.subr.bf16.mxu0 0
  %260 = vmatpush1.bf16.msra.mxu0 0
  %261 = vmatprep.subr.bf16.mxu0 0
  %262 = vmatpush1.bf16.msra.mxu0 0
  %263 = vmatprep.subr.bf16.mxu0 0
  %264 = vmatpush1.bf16.msra.mxu0 0
  %265 = vmatprep.subr.bf16.mxu0 0
  %266 = vmatpush1.bf16.msra.mxu0 0
  %267 = vmatprep.subr.bf16.mxu0 0
  %268 = vmatpush1.bf16.msra.mxu0 0
  %269 = vmatprep.subr.bf16.mxu0 0
  %270 = vmatpush1.bf16.msra.mxu0 0
  %271 = vmatprep.subr.bf16.mxu0 0
  %272 = vmatpush1.bf16.msra.mxu0 0
  %273 = vmatprep.subr.bf16.mxu0 0
  %274 = vmatpush1.bf16.msra.mxu0 0
  %275 = vmatprep.subr.bf16.mxu0 0
  %276 = vmatpush1.bf16.msra.mxu0 0
  %277 = vmatprep.mubr.bf16.mxu0 0
  %278 = vmatmul.mubr.bf16.gmra.mrb[0].mxu0 %v243
  %v279 = vpop.f32.mrb[0].mxu0
  %v280 = vadd.f32 0.0, %v279
  %v281 = vpop.f32.mrb[0].mxu0
  %v282 = vadd.f32 0.0, %v281
  %v283 = vpop.f32.mrb[0].mxu0
  %v284 = vpop.f32.mrb[0].mxu0
  %285 = vdwg.mxu0
  %v286 = vpack.c.bf16 %v280, %v280
  %288 = vrot.lane.b32.xlu0 %v286, 112
  %v289 = vpop.permute.xlu0 %288
  %v291 = vsel %vm100, %v286, 0
  %v294 = vsel %vm100, %v289, 0
  %296 = vmatprep.subr.bf16.mxu0 0
  %297 = vmatpush1.bf16.xpose.msra.mxu0 %v294
  %298 = vmatprep.subr.bf16.mxu0 0
  %299 = vmatpush1.bf16.xpose.msra.mxu0 0
  %300 = vmatprep.subr.bf16.mxu0 0
  %301 = vmatpush1.bf16.xpose.msra.mxu0 0
  %302 = vmatprep.subr.bf16.mxu0 0
  %303 = vmatpush1.bf16.xpose.msra.mxu0 0
  %304 = vmatprep.subr.bf16.mxu0 0
  %305 = vmatpush1.bf16.xpose.msra.mxu0 0
  %306 = vmatprep.subr.bf16.mxu0 0
  %307 = vmatpush1.bf16.xpose.msra.mxu0 0
  %308 = vmatprep.subr.bf16.mxu0 0
  %309 = vmatpush1.bf16.xpose.msra.mxu0 0
  %310 = vmatprep.subr.bf16.mxu0 0
  %311 = vmatpush1.bf16.xpose.msra.mxu0 0
  %312 = vmatprep.subr.bf16.mxu0 0
  %313 = vmatpush1.bf16.xpose.msra.mxu0 0
  %314 = vmatprep.subr.bf16.mxu0 0
  %315 = vmatpush1.bf16.xpose.msra.mxu0 0
  %316 = vmatprep.subr.bf16.mxu0 0
  %317 = vmatpush1.bf16.xpose.msra.mxu0 0
  %318 = vmatprep.subr.bf16.mxu0 0
  %319 = vmatpush1.bf16.xpose.msra.mxu0 0
  %320 = vmatprep.subr.bf16.mxu0 0
  %321 = vmatpush1.bf16.xpose.msra.mxu0 0
  %322 = vmatprep.subr.bf16.mxu0 0
  %323 = vmatpush1.bf16.xpose.msra.mxu0 0
  %324 = vmatprep.subr.bf16.mxu0 0
  %325 = vmatpush1.bf16.xpose.msra.mxu0 0
  %326 = vmatprep.subr.bf16.mxu0 0
  %327 = vmatpush1.bf16.xpose.msra.mxu0 0
  %328 = vmatprep.mubr.bf16.mxu0 0
  %329 = vmatmul.mubr.bf16.gmra.mrb[0].mxu0 %v291
  %v330 = vpop.f32.mrb[0].mxu0
  %v331 = vadd.f32 0.0, %v330
  %v332 = vpop.f32.mrb[0].mxu0
  %v333 = vpop.f32.mrb[0].mxu0
  %v334 = vpop.f32.mrb[0].mxu0
  %335 = vdwg.mxu0
  %v336 = vmul.f32 %v331, 0.25
  %v337 = vadd.f32 %v336, %v174
  %vm338 = vcmask 46080
  %v339 = vsel %vm338, %v337, -inf
  %340 = vmax.xlane.f32.xlu0 %v339
  %v341 = vpop.xlane.xlu0 %340
  %v342 = vsub.f32 %v337, %v341
  %v343 = vmul.f32 %v342, 1.442695
  %v344 = vpow.pop %v343
  %v345 = vsel %vm338, %v344, 0.0
  %346 = vadd.xlane.f32.xlu0 %v345
  %v347 = vpop.xlane.xlu0 %346
  %v348 = vrcp.pop %v347
  %v349 = vmul.f32 %v344, %v348
  %v350 = vpack.c.bf16 %v349, %v349
  %351 = vrot.lane.b32.xlu0 %v286, 96
  %v352 = vpop.permute.xlu0 %351
  %vm353 = vcmask 48128
  %v355 = vsel %vm353, %v350, 0
  %vm357 = vcmask 1042432
  %v359 = vsel %vm357, %v352, 0
  %361 = vmatprep.subr.bf16.mxu0 0
  %362 = vmatpush1.bf16.msra.mxu0 %v359
  %363 = vmatprep.subr.bf16.mxu0 0
  %364 = vmatpush1.bf16.msra.mxu0 0
  %365 = vmatprep.subr.bf16.mxu0 0
  %366 = vmatpush1.bf16.msra.mxu0 0
  %367 = vmatprep.subr.bf16.mxu0 0
  %368 = vmatpush1.bf16.msra.mxu0 0
  %369 = vmatprep.subr.bf16.mxu0 0
  %370 = vmatpush1.bf16.msra.mxu0 0
  %371 = vmatprep.subr.bf16.mxu0 0
  %372 = vmatpush1.bf16.msra.mxu0 0
  %373 = vmatprep.subr.bf16.mxu0 0
  %374 = vmatpush1.bf16.msra.mxu0 0
  %375 = vmatprep.subr.bf16.mxu0 0
  %376 = vmatpush1.bf16.msra.mxu0 0
  %377 = vmatprep.subr.bf16.mxu0 0
  %378 = vmatpush1.bf16.msra.mxu0 0
  %379 = vmatprep.subr.bf16.mxu0 0
  %380 = vmatpush1.bf16.msra.mxu0 0
  %381 = vmatprep.subr.bf16.mxu0 0
  %382 = vmatpush1.bf16.msra.mxu0 0
  %383 = vmatprep.subr.bf16.mxu0 0
  %384 = vmatpush1.bf16.msra.mxu0 0
  %385 = vmatprep.subr.bf16.mxu0 0
  %386 = vmatpush1.bf16.msra.mxu0 0
  %387 = vmatprep.subr.bf16.mxu0 0
  %388 = vmatpush1.bf16.msra.mxu0 0
  %389 = vmatprep.subr.bf16.mxu0 0
  %390 = vmatpush1.bf16.msra.mxu0 0
  %391 = vmatprep.subr.bf16.mxu0 0
  %392 = vmatpush1.bf16.msra.mxu0 0
  %393 = vmatprep.mubr.bf16.mxu0 0
  %394 = vmatmul.mubr.bf16.gmra.mrb[0].mxu0 %v355
  %v395 = vpop.f32.mrb[0].mxu0
  %v396 = vadd.f32 0.0, %v395
  %v397 = vpop.f32.mrb[0].mxu0
  %v398 = vpop.f32.mrb[0].mxu0
  %v399 = vpop.f32.mrb[0].mxu0
  %400 = vdwg.mxu0
  %401 = vrot.lane.b32.xlu0 %v286, 80
  %v402 = vpop.permute.xlu0 %401
  %403 = vrot.lane.b32.xlu0 %v286, 64
  %v404 = vpop.permute.xlu0 %403
  %v406 = vsel %vm100, %v402, 0
  %v409 = vsel %vm100, %v404, 0
  %411 = vmatprep.subr.bf16.mxu0 0
  %412 = vmatpush1.bf16.xpose.msra.mxu0 %v409
  %413 = vmatprep.subr.bf16.mxu0 0
  %414 = vmatpush1.bf16.xpose.msra.mxu0 0
  %415 = vmatprep.subr.bf16.mxu0 0
  %416 = vmatpush1.bf16.xpose.msra.mxu0 0
  %417 = vmatprep.subr.bf16.mxu0 0
  %418 = vmatpush1.bf16.xpose.msra.mxu0 0
  %419 = vmatprep.subr.bf16.mxu0 0
  %420 = vmatpush1.bf16.xpose.msra.mxu0 0
  %421 = vmatprep.subr.bf16.mxu0 0
  %422 = vmatpush1.bf16.xpose.msra.mxu0 0
  %423 = vmatprep.subr.bf16.mxu0 0
  %424 = vmatpush1.bf16.xpose.msra.mxu0 0
  %425 = vmatprep.subr.bf16.mxu0 0
  %426 = vmatpush1.bf16.xpose.msra.mxu0 0
  %427 = vmatprep.subr.bf16.mxu0 0
  %428 = vmatpush1.bf16.xpose.msra.mxu0 0
  %429 = vmatprep.subr.bf16.mxu0 0
  %430 = vmatpush1.bf16.xpose.msra.mxu0 0
  %431 = vmatprep.subr.bf16.mxu0 0
  %432 = vmatpush1.bf16.xpose.msra.mxu0 0
  %433 = vmatprep.subr.bf16.mxu0 0
  %434 = vmatpush1.bf16.xpose.msra.mxu0 0
  %435 = vmatprep.subr.bf16.mxu0 0
  %436 = vmatpush1.bf16.xpose.msra.mxu0 0
  %437 = vmatprep.subr.bf16.mxu0 0
  %438 = vmatpush1.bf16.xpose.msra.mxu0 0
  %439 = vmatprep.subr.bf16.mxu0 0
  %440 = vmatpush1.bf16.xpose.msra.mxu0 0
  %441 = vmatprep.subr.bf16.mxu0 0
  %442 = vmatpush1.bf16.xpose.msra.mxu0 0
  %443 = vmatprep.mubr.bf16.mxu0 0
  %444 = vmatmul.mubr.bf16.gmra.mrb[0].mxu0 %v406
  %v445 = vpop.f32.mrb[0].mxu0
  %v446 = vadd.f32 0.0, %v445
  %v447 = vpop.f32.mrb[0].mxu0
  %v448 = vpop.f32.mrb[0].mxu0
  %v449 = vpop.f32.mrb[0].mxu0
  %450 = vdwg.mxu0
  %v451 = vmul.f32 %v446, 0.25
  %v452 = vadd.f32 %v451, %v174
  %v453 = vsel %vm338, %v452, -inf
  %454 = vmax.xlane.f32.xlu0 %v453
  %v455 = vpop.xlane.xlu0 %454
  %v456 = vsub.f32 %v452, %v455
  %v457 = vmul.f32 %v456, 1.442695
  %v458 = vpow.pop %v457
  %v459 = vsel %vm338, %v458, 0.0
  %460 = vadd.xlane.f32.xlu0 %v459
  %v461 = vpop.xlane.xlu0 %460
  %v462 = vrcp.pop %v461
  %v463 = vmul.f32 %v458, %v462
  %v464 = vpack.c.bf16 %v463, %v463
  %465 = vrot.lane.b32.xlu0 %v286, 48
  %v466 = vpop.permute.xlu0 %465
  %v468 = vsel %vm353, %v464, 0
  %v471 = vsel %vm357, %v466, 0
  %473 = vmatprep.subr.bf16.mxu0 0
  %474 = vmatpush1.bf16.msra.mxu0 %v471
  %475 = vmatprep.subr.bf16.mxu0 0
  %476 = vmatpush1.bf16.msra.mxu0 0
  %477 = vmatprep.subr.bf16.mxu0 0
  %478 = vmatpush1.bf16.msra.mxu0 0
  %479 = vmatprep.subr.bf16.mxu0 0
  %480 = vmatpush1.bf16.msra.mxu0 0
  %481 = vmatprep.subr.bf16.mxu0 0
  %482 = vmatpush1.bf16.msra.mxu0 0
  %483 = vmatprep.subr.bf16.mxu0 0
  %484 = vmatpush1.bf16.msra.mxu0 0
  %485 = vmatprep.subr.bf16.mxu0 0
  %486 = vmatpush1.bf16.msra.mxu0 0
  %487 = vmatprep.subr.bf16.mxu0 0
  %488 = vmatpush1.bf16.msra.mxu0 0
  %489 = vmatprep.subr.bf16.mxu0 0
  %490 = vmatpush1.bf16.msra.mxu0 0
  %491 = vmatprep.subr.bf16.mxu0 0
  %492 = vmatpush1.bf16.msra.mxu0 0
  %493 = vmatprep.subr.bf16.mxu0 0
  %494 = vmatpush1.bf16.msra.mxu0 0
  %495 = vmatprep.subr.bf16.mxu0 0
  %496 = vmatpush1.bf16.msra.mxu0 0
  %497 = vmatprep.subr.bf16.mxu0 0
  %498 = vmatpush1.bf16.msra.mxu0 0
  %499 = vmatprep.subr.bf16.mxu0 0
  %500 = vmatpush1.bf16.msra.mxu0 0
  %501 = vmatprep.subr.bf16.mxu0 0
  %502 = vmatpush1.bf16.msra.mxu0 0
  %503 = vmatprep.subr.bf16.mxu0 0
  %504 = vmatpush1.bf16.msra.mxu0 0
  %505 = vmatprep.mubr.bf16.mxu0 0
  %506 = vmatmul.mubr.bf16.gmra.mrb[0].mxu0 %v468
  %v507 = vpop.f32.mrb[0].mxu0
  %v508 = vadd.f32 0.0, %v507
  %v509 = vpop.f32.mrb[0].mxu0
  %v510 = vpop.f32.mrb[0].mxu0
  %v511 = vpop.f32.mrb[0].mxu0
  %512 = vdwg.mxu0
  %v513 = vpack.c.bf16 %v282, %v282
  %514 = vrot.lane.b32.xlu0 %v286, 32
  %v515 = vpop.permute.xlu0 %514
  %516 = vrot.lane.b32.xlu0 %v286, 16
  %v517 = vpop.permute.xlu0 %516
  %v519 = vsel %vm100, %v515, 0
  %v522 = vsel %vm100, %v517, 0
  %524 = vmatprep.subr.bf16.mxu0 0
  %525 = vmatpush1.bf16.xpose.msra.mxu0 %v522
  %526 = vmatprep.subr.bf16.mxu0 0
  %527 = vmatpush1.bf16.xpose.msra.mxu0 0
  %528 = vmatprep.subr.bf16.mxu0 0
  %529 = vmatpush1.bf16.xpose.msra.mxu0 0
  %530 = vmatprep.subr.bf16.mxu0 0
  %531 = vmatpush1.bf16.xpose.msra.mxu0 0
  %532 = vmatprep.subr.bf16.mxu0 0
  %533 = vmatpush1.bf16.xpose.msra.mxu0 0
  %534 = vmatprep.subr.bf16.mxu0 0
  %535 = vmatpush1.bf16.xpose.msra.mxu0 0
  %536 = vmatprep.subr.bf16.mxu0 0
  %537 = vmatpush1.bf16.xpose.msra.mxu0 0
  %538 = vmatprep.subr.bf16.mxu0 0
  %539 = vmatpush1.bf16.xpose.msra.mxu0 0
  %540 = vmatprep.subr.bf16.mxu0 0
  %541 = vmatpush1.bf16.xpose.msra.mxu0 0
  %542 = vmatprep.subr.bf16.mxu0 0
  %543 = vmatpush1.bf16.xpose.msra.mxu0 0
  %544 = vmatprep.subr.bf16.mxu0 0
  %545 = vmatpush1.bf16.xpose.msra.mxu0 0
  %546 = vmatprep.subr.bf16.mxu0 0
  %547 = vmatpush1.bf16.xpose.msra.mxu0 0
  %548 = vmatprep.subr.bf16.mxu0 0
  %549 = vmatpush1.bf16.xpose.msra.mxu0 0
  %550 = vmatprep.subr.bf16.mxu0 0
  %551 = vmatpush1.bf16.xpose.msra.mxu0 0
  %552 = vmatprep.subr.bf16.mxu0 0
  %553 = vmatpush1.bf16.xpose.msra.mxu0 0
  %554 = vmatprep.subr.bf16.mxu0 0
  %555 = vmatpush1.bf16.xpose.msra.mxu0 0
  %556 = vmatprep.mubr.bf16.mxu0 0
  %557 = vmatmul.mubr.bf16.gmra.mrb[0].mxu0 %v519
  %v558 = vpop.f32.mrb[0].mxu0
  %v559 = vadd.f32 0.0, %v558
  %v560 = vpop.f32.mrb[0].mxu0
  %v561 = vpop.f32.mrb[0].mxu0
  %v562 = vpop.f32.mrb[0].mxu0
  %563 = vdwg.mxu0
  %v564 = vmul.f32 %v559, 0.25
  %v565 = vadd.f32 %v564, %v174
  %v566 = vsel %vm338, %v565, -inf
  %567 = vmax.xlane.f32.xlu0 %v566
  %v568 = vpop.xlane.xlu0 %567
  %v569 = vsub.f32 %v565, %v568
  %v570 = vmul.f32 %v569, 1.442695
  %v571 = vpow.pop %v570
  %v572 = vsel %vm338, %v571, 0.0
  %573 = vadd.xlane.f32.xlu0 %v572
  %v574 = vpop.xlane.xlu0 %573
  %v575 = vrcp.pop %v574
  %v576 = vmul.f32 %v571, %v575
  %v577 = vpack.c.bf16 %v576, %v576
  %v579 = vsel %vm353, %v577, 0
  %v582 = vsel %vm357, %v513, 0
  %584 = vmatprep.subr.bf16.mxu0 0
  %585 = vmatpush1.bf16.msra.mxu0 %v582
  %586 = vmatprep.subr.bf16.mxu0 0
  %587 = vmatpush1.bf16.msra.mxu0 0
  %588 = vmatprep.subr.bf16.mxu0 0
  %589 = vmatpush1.bf16.msra.mxu0 0
  %590 = vmatprep.subr.bf16.mxu0 0
  %591 = vmatpush1.bf16.msra.mxu0 0
  %592 = vmatprep.subr.bf16.mxu0 0
  %593 = vmatpush1.bf16.msra.mxu0 0
  %594 = vmatprep.subr.bf16.mxu0 0
  %595 = vmatpush1.bf16.msra.mxu0 0
  %596 = vmatprep.subr.bf16.mxu0 0
  %597 = vmatpush1.bf16.msra.mxu0 0
  %598 = vmatprep.subr.bf16.mxu0 0
  %599 = vmatpush1.bf16.msra.mxu0 0
  %600 = vmatprep.subr.bf16.mxu0 0
  %601 = vmatpush1.bf16.msra.mxu0 0
  %602 = vmatprep.subr.bf16.mxu0 0
  %603 = vmatpush1.bf16.msra.mxu0 0
  %604 = vmatprep.subr.bf16.mxu0 0
  %605 = vmatpush1.bf16.msra.mxu0 0
  %606 = vmatprep.subr.bf16.mxu0 0
  %607 = vmatpush1.bf16.msra.mxu0 0
  %608 = vmatprep.subr.bf16.mxu0 0
  %609 = vmatpush1.bf16.msra.mxu0 0
  %610 = vmatprep.subr.bf16.mxu0 0
  %611 = vmatpush1.bf16.msra.mxu0 0
  %612 = vmatprep.subr.bf16.mxu0 0
  %613 = vmatpush1.bf16.msra.mxu0 0
  %614 = vmatprep.subr.bf16.mxu0 0
  %615 = vmatpush1.bf16.msra.mxu0 0
  %616 = vmatprep.mubr.bf16.mxu0 0
  %617 = vmatmul.mubr.bf16.gmra.mrb[0].mxu0 %v579
  %v618 = vpop.f32.mrb[0].mxu0
  %v619 = vadd.f32 0.0, %v618
  %v620 = vpop.f32.mrb[0].mxu0
  %v621 = vpop.f32.mrb[0].mxu0
  %v622 = vpop.f32.mrb[0].mxu0
  %623 = vdwg.mxu0
  %625 = vrot.lane.b32.xlu0 %v508, 16
  %v626 = vpop.permute.xlu0 %625
  %629 = vrot.lane.b32.xlu0 %v619, 32
  %v630 = vpop.permute.xlu0 %629
  %v632 = vsel %vm100, %v396, %v626
  %vm633 = vcmask 261120
  %v634 = vsel %vm633, %v632, %v630
  %v635 = vpack.c.bf16 %v634, %v634
  %v636 = vld [vmem:[%s8] sm:$0xf]
  %v637 = vld [vmem:[%s8 + $0x4] sm:$0xf]
  %v638 = vld [vmem:[%s8 + $0x8] sm:$0xf]
  %v639 = vld [vmem:[%s8 + $0xc] sm:$0xf]
  %v640 = vld [vmem:[%s8 + $0x10] sm:$0xf]
  %v641 = vld [vmem:[%s8 + $0x14] sm:$0xf]
  %v642 = vlaneseq
  %v643 = vshrl.u32 %v642, 7
  %v644 = vsub.s32 2, %v643
  %v645 = vrot.slane %v175, %v644
  %v652 = vunpack.c.l.b16 %v636
  %v653 = vunpack.c.l.b16 %v637
  %v654 = vunpack.c.l.b16 %v638
  %v655 = vunpack.c.l.b16 %v639
  %v656 = vunpack.c.l.b16 %v640
  %v657 = vunpack.c.l.b16 %v641
  %v658 = vpack.c.b16 %v653, %v652
  %v659 = vpack.c.b16 %v655, %v654
  %v660 = vpack.c.b16 %v657, %v656
  %v665 = vsel %vm241, %v635, 0
  %667 = vmatprep.subr.bf16.mxu0 0
  %668 = vmatpush1.bf16.msra.mxu0 %v658
  %669 = vmatprep.subr.bf16.mxu0 0
  %670 = vmatpush1.bf16.msra.mxu0 %v659
  %671 = vmatprep.subr.bf16.mxu0 0
  %672 = vmatpush1.bf16.msra.mxu0 %v660
  %673 = vmatprep.subr.bf16.mxu0 0
  %674 = vmatpush1.bf16.msra.mxu0 0
  %675 = vmatprep.subr.bf16.mxu0 0
  %676 = vmatpush1.bf16.msra.mxu0 0
  %677 = vmatprep.subr.bf16.mxu0 0
  %678 = vmatpush1.bf16.msra.mxu0 0
  %679 = vmatprep.subr.bf16.mxu0 0
  %680 = vmatpush1.bf16.msra.mxu0 0
  %681 = vmatprep.subr.bf16.mxu0 0
  %682 = vmatpush1.bf16.msra.mxu0 0
  %683 = vmatprep.subr.bf16.mxu0 0
  %684 = vmatpush1.bf16.msra.mxu0 0
  %685 = vmatprep.subr.bf16.mxu0 0
  %686 = vmatpush1.bf16.msra.mxu0 0
  %687 = vmatprep.subr.bf16.mxu0 0
  %688 = vmatpush1.bf16.msra.mxu0 0
  %689 = vmatprep.subr.bf16.mxu0 0
  %690 = vmatpush1.bf16.msra.mxu0 0
  %691 = vmatprep.subr.bf16.mxu0 0
  %692 = vmatpush1.bf16.msra.mxu0 0
  %693 = vmatprep.subr.bf16.mxu0 0
  %694 = vmatpush1.bf16.msra.mxu0 0
  %695 = vmatprep.subr.bf16.mxu0 0
  %696 = vmatpush1.bf16.msra.mxu0 0
  %697 = vmatprep.subr.bf16.mxu0 0
  %698 = vmatpush1.bf16.msra.mxu0 0
  %699 = vmatprep.mubr.bf16.mxu0 0
  %700 = vmatmul.mubr.bf16.gmra.mrb[0].mxu0 %v665
  %v701 = vpop.f32.mrb[0].mxu0
  %v702 = vadd.f32 %v645, %v701
  %v703 = vpop.f32.mrb[0].mxu0
  %v704 = vpop.f32.mrb[0].mxu0
  %v705 = vpop.f32.mrb[0].mxu0
  %706 = vdwg.mxu0
  %v707 = vadd.f32 %v171, %v702
  %v708 = vsel %vm179, %v707, 0.0
  %709 = vadd.xlane.f32.xlu0 %v708
  %v710 = vpop.xlane.xlu0 %709
  %v711 = vmul.f32 %v710, %v183
  %v712 = vsub.f32 %v707, %v711
  %v713 = vmul.f32 %v712, %v712
  %v714 = vsel %vm179, %v713, 0.0
  %715 = vadd.xlane.f32.xlu0 %v714
  %v716 = vpop.xlane.xlu0 %715
  %v717 = vmul.f32 %v716, %v183
  %v718 = vadd.f32 %v717, 1e-05
  %v719 = vrsqrt.pop %v718
  %v720 = vmul.f32 %v712, %v719
  %v721 = vlaneseq
  %v722 = vshrl.u32 %v721, 7
  %v723 = vsub.s32 3, %v722
  %v724 = vrot.slane %v175, %v723
  %v725 = vmul.f32 %v720, %v724
  %v726 = vlaneseq
  %v727 = vshrl.u32 %v726, 7
  %v728 = vsub.s32 4, %v727
  %v729 = vrot.slane %v175, %v728
  %v730 = vadd.f32 %v725, %v729
  %v731 = vpack.c.bf16 %v730, %v730
  %v732 = vld [vmem:[%s9] sm:$0xff]
  %v733 = vld [vmem:[%s9 + $0x8] sm:$0xff]
  %v734 = vld [vmem:[%s9 + $0x10] sm:$0xff]
  %v735 = vld [vmem:[%s9 + $0x18] sm:$0xff]
  %v736 = vld [vmem:[%s9 + $0x20] sm:$0xff]
  %v737 = vld [vmem:[%s9 + $0x28] sm:$0xff]
  %v738 = vlaneseq
  %v739 = vshrl.u32 %v738, 7
  %v740 = vsub.s32 5, %v739
  %v741 = vrot.slane %v175, %v740
  %v742 = vlaneseq
  %v743 = vshrl.u32 %v742, 7
  %v744 = vsub.s32 5, %v743
  %v745 = vrot.slane %v176, %v744
  %v752 = vunpack.c.l.b16 %v732
  %v753 = vunpack.c.h.b16 %v732
  %v754 = vunpack.c.l.b16 %v733
  %v755 = vunpack.c.h.b16 %v733
  %v756 = vunpack.c.l.b16 %v734
  %v757 = vunpack.c.h.b16 %v734
  %v758 = vunpack.c.l.b16 %v735
  %v759 = vunpack.c.h.b16 %v735
  %v760 = vunpack.c.l.b16 %v736
  %v761 = vunpack.c.h.b16 %v736
  %v762 = vunpack.c.l.b16 %v737
  %v763 = vunpack.c.h.b16 %v737
  %v764 = vpack.c.b16 %v754, %v752
  %v765 = vpack.c.b16 %v755, %v753
  %v766 = vpack.c.b16 %v758, %v756
  %v767 = vpack.c.b16 %v759, %v757
  %v768 = vpack.c.b16 %v762, %v760
  %v769 = vpack.c.b16 %v763, %v761
  %v777 = vsel %vm241, %v731, 0
  %779 = vmatprep.subr.bf16.mxu0 %v765
  %780 = vmatpush1.bf16.msra.mxu0 %v764
  %781 = vmatprep.subr.bf16.mxu0 %v767
  %782 = vmatpush1.bf16.msra.mxu0 %v766
  %783 = vmatprep.subr.bf16.mxu0 %v769
  %784 = vmatpush1.bf16.msra.mxu0 %v768
  %785 = vmatprep.subr.bf16.mxu0 0
  %786 = vmatpush1.bf16.msra.mxu0 0
  %787 = vmatprep.subr.bf16.mxu0 0
  %788 = vmatpush1.bf16.msra.mxu0 0
  %789 = vmatprep.subr.bf16.mxu0 0
  %790 = vmatpush1.bf16.msra.mxu0 0
  %791 = vmatprep.subr.bf16.mxu0 0
  %792 = vmatpush1.bf16.msra.mxu0 0
  %793 = vmatprep.subr.bf16.mxu0 0
  %794 = vmatpush1.bf16.msra.mxu0 0
  %795 = vmatprep.subr.bf16.mxu0 0
  %796 = vmatpush1.bf16.msra.mxu0 0
  %797 = vmatprep.subr.bf16.mxu0 0
  %798 = vmatpush1.bf16.msra.mxu0 0
  %799 = vmatprep.subr.bf16.mxu0 0
  %800 = vmatpush1.bf16.msra.mxu0 0
  %801 = vmatprep.subr.bf16.mxu0 0
  %802 = vmatpush1.bf16.msra.mxu0 0
  %803 = vmatprep.subr.bf16.mxu0 0
  %804 = vmatpush1.bf16.msra.mxu0 0
  %805 = vmatprep.subr.bf16.mxu0 0
  %806 = vmatpush1.bf16.msra.mxu0 0
  %807 = vmatprep.subr.bf16.mxu0 0
  %808 = vmatpush1.bf16.msra.mxu0 0
  %809 = vmatprep.subr.bf16.mxu0 0
  %810 = vmatpush1.bf16.msra.mxu0 0
  %811 = vmatprep.mubr.bf16.mxu0 0
  %812 = vmatmul.mubr.bf16.gmra.mrb[0].mxu0 %v777
  %v813 = vpop.f32.mrb[0].mxu0
  %v814 = vadd.f32 %v741, %v813
  %v815 = vpop.f32.mrb[0].mxu0
  %v816 = vadd.f32 %v745, %v815
  %v817 = vpop.f32.mrb[0].mxu0
  %v818 = vpop.f32.mrb[0].mxu0
  %819 = vdwg.mxu0
  %v820 = vmul.f32 %v814, 0.5
  %v821 = vmul.f32 %v816, 0.5
  %v822 = vmul.f32 %v814, 0.70710677
  %v823 = vmul.f32 %v816, 0.70710677
  %v824 = verf.f32.pop %v822
  %v825 = verf.f32.pop %v823
  %v826 = vadd.f32 %v824, 1.0
  %v827 = vadd.f32 %v825, 1.0
  %v828 = vmul.f32 %v820, %v826
  %v829 = vmul.f32 %v821, %v827
  %v830 = vpack.c.bf16 %v828, %v828
  %v831 = vpack.c.bf16 %v829, %v829
  %v832 = vld [vmem:[%s10] sm:$0xf]
  %v833 = vld [vmem:[%s10 + $0x4] sm:$0xf]
  %v834 = vld [vmem:[%s10 + $0x8] sm:$0xf]
  %v835 = vld [vmem:[%s10 + $0xc] sm:$0xf]
  %v836 = vld [vmem:[%s10 + $0x10] sm:$0xf]
  %v837 = vld [vmem:[%s10 + $0x14] sm:$0xf]
  %v838 = vld [vmem:[%s10 + $0x18] sm:$0xf]
  %v839 = vld [vmem:[%s10 + $0x1c] sm:$0xf]
  %v840 = vld [vmem:[%s10 + $0x20] sm:$0xf]
  %v841 = vld [vmem:[%s10 + $0x24] sm:$0xf]
  %v842 = vld [vmem:[%s10 + $0x28] sm:$0xf]
  %v843 = vld [vmem:[%s10 + $0x2c] sm:$0xf]
  %v844 = vld [vmem:[%s10 + $0x30] sm:$0xf]
  %v845 = vld [vmem:[%s10 + $0x34] sm:$0xf]
  %v846 = vld [vmem:[%s10 + $0x38] sm:$0xf]
  %v847 = vld [vmem:[%s10 + $0x3c] sm:$0xf]
  %v848 = vld [vmem:[%s10 + $0x40] sm:$0xf]
  %v849 = vld [vmem:[%s10 + $0x44] sm:$0xf]
  %v850 = vld [vmem:[%s10 + $0x48] sm:$0xf]
  %v851 = vld [vmem:[%s10 + $0x4c] sm:$0xf]
  %v852 = vld [vmem:[%s10 + $0x50] sm:$0xf]
  %v853 = vld [vmem:[%s10 + $0x54] sm:$0xf]
  %v854 = vld [vmem:[%s10 + $0x58] sm:$0xf]
  %v855 = vld [vmem:[%s10 + $0x5c] sm:$0xf]
  %v856 = vlaneseq
  %v857 = vshrl.u32 %v856, 7
  %v858 = vsub.s32 6, %v857
  %v859 = vrot.slane %v175, %v858
  %v884 = vunpack.c.l.b16 %v832
  %v885 = vunpack.c.l.b16 %v833
  %v886 = vunpack.c.l.b16 %v834
  %v887 = vunpack.c.l.b16 %v835
  %v888 = vunpack.c.l.b16 %v836
  %v889 = vunpack.c.l.b16 %v837
  %v890 = vunpack.c.l.b16 %v838
  %v891 = vunpack.c.l.b16 %v839
  %v892 = vunpack.c.l.b16 %v840
  %v893 = vunpack.c.l.b16 %v841
  %v894 = vunpack.c.l.b16 %v842
  %v895 = vunpack.c.l.b16 %v843
  %v896 = vunpack.c.l.b16 %v844
  %v897 = vunpack.c.l.b16 %v845
  %v898 = vunpack.c.l.b16 %v846
  %v899 = vunpack.c.l.b16 %v847
  %v900 = vunpack.c.l.b16 %v848
  %v901 = vunpack.c.l.b16 %v849
  %v902 = vunpack.c.l.b16 %v850
  %v903 = vunpack.c.l.b16 %v851
  %v904 = vunpack.c.l.b16 %v852
  %v905 = vunpack.c.l.b16 %v853
  %v906 = vunpack.c.l.b16 %v854
  %v907 = vunpack.c.l.b16 %v855
  %v908 = vpack.c.b16 %v885, %v884
  %v909 = vpack.c.b16 %v887, %v886
  %v910 = vpack.c.b16 %v889, %v888
  %v911 = vpack.c.b16 %v891, %v890
  %v912 = vpack.c.b16 %v893, %v892
  %v913 = vpack.c.b16 %v895, %v894
  %v914 = vpack.c.b16 %v897, %v896
  %v915 = vpack.c.b16 %v899, %v898
  %v916 = vpack.c.b16 %v901, %v900
  %v917 = vpack.c.b16 %v903, %v902
  %v918 = vpack.c.b16 %v905, %v904
  %v919 = vpack.c.b16 %v907, %v906
  %vm932 = vcmask 523264
  %v934 = vsel %vm932, %v831, 0
  %936 = vmatprep.subr.bf16.mxu0 0
  %937 = vmatpush1.bf16.msra.mxu0 %v908
  %938 = vmatprep.subr.bf16.mxu0 0
  %939 = vmatpush1.bf16.msra.mxu0 %v909
  %940 = vmatprep.subr.bf16.mxu0 0
  %941 = vmatpush1.bf16.msra.mxu0 %v910
  %942 = vmatprep.subr.bf16.mxu0 0
  %943 = vmatpush1.bf16.msra.mxu0 %v911
  %944 = vmatprep.subr.bf16.mxu0 0
  %945 = vmatpush1.bf16.msra.mxu0 %v912
  %946 = vmatprep.subr.bf16.mxu0 0
  %947 = vmatpush1.bf16.msra.mxu0 %v913
  %948 = vmatprep.subr.bf16.mxu0 0
  %949 = vmatpush1.bf16.msra.mxu0 %v914
  %950 = vmatprep.subr.bf16.mxu0 0
  %951 = vmatpush1.bf16.msra.mxu0 %v915
  %952 = vmatprep.subr.bf16.mxu0 0
  %953 = vmatpush1.bf16.msra.mxu0 %v916
  %954 = vmatprep.subr.bf16.mxu0 0
  %955 = vmatpush1.bf16.msra.mxu0 %v917
  %956 = vmatprep.subr.bf16.mxu0 0
  %957 = vmatpush1.bf16.msra.mxu0 %v918
  %958 = vmatprep.subr.bf16.mxu0 0
  %959 = vmatpush1.bf16.msra.mxu0 %v919
  %960 = vmatprep.subr.bf16.mxu0 0
  %961 = vmatpush1.bf16.msra.mxu0 0
  %962 = vmatprep.subr.bf16.mxu0 0
  %963 = vmatpush1.bf16.msra.mxu0 0
  %964 = vmatprep.subr.bf16.mxu0 0
  %965 = vmatpush1.bf16.msra.mxu0 0
  %966 = vmatprep.subr.bf16.mxu0 0
  %967 = vmatpush1.bf16.msra.mxu0 0
  %968 = vmatprep.mubr.bf16.mxu0 %v934
  %969 = vmatmul.mubr.bf16.gmra.mrb[0].mxu0 %v830
  %v970 = vpop.f32.mrb[0].mxu0
  %v971 = vadd.f32 %v859, %v970
  %v972 = vpop.f32.mrb[0].mxu0
  %v973 = vpop.f32.mrb[0].mxu0
  %v974 = vpop.f32.mrb[0].mxu0
  %975 = vdwg.mxu0
  %v976 = vadd.f32 %v707, %v971
  %v977 = vsel %vm179, %v976, 0.0
  %978 = vadd.xlane.f32.xlu0 %v977
  %v979 = vpop.xlane.xlu0 %978
  %v980 = vmul.f32 %v979, %v183
  %v981 = vsub.f32 %v976, %v980
  %v982 = vmul.f32 %v981, %v981
  %v983 = vsel %vm179, %v982, 0.0
  %984 = vadd.xlane.f32.xlu0 %v983
  %v985 = vpop.xlane.xlu0 %984
  %v986 = vmul.f32 %v985, %v183
  %v987 = vadd.f32 %v986, 1e-05
  %v988 = vrsqrt.pop %v987
  %v989 = vmul.f32 %v981, %v988
  %v990 = vlaneseq
  %v991 = vshrl.u32 %v990, 7
  %v992 = vsub.s32 7, %v991
  %v993 = vrot.slane %v175, %v992
  %v994 = vmul.f32 %v989, %v993
  %v995 = vlaneseq
  %v996 = vshrl.u32 %v995, 7
  %v997 = vsub.s32 0, %v996
  %v998 = vrot.slane %v177, %v997
  %v999 = vadd.f32 %v994, %v998
  %v1000 = vpack.c.bf16 %v999, %v999
  %s1001 = scalar_lea.vmem %s7, 48
  %v1002 = vld [vmem:[%s1001] sm:$0xff]
  %v1003 = vld [vmem:[%s1001 + $0x8] sm:$0xff]
  %v1004 = vld [vmem:[%s1001 + $0x10] sm:$0xff]
  %v1005 = vld [vmem:[%s1001 + $0x18] sm:$0xff]
  %v1006 = vld [vmem:[%s1001 + $0x20] sm:$0xff]
  %v1007 = vld [vmem:[%s1001 + $0x28] sm:$0xff]
  %v1014 = vunpack.c.l.b16 %v1002
  %v1015 = vunpack.c.h.b16 %v1002
  %v1016 = vunpack.c.l.b16 %v1003
  %v1017 = vunpack.c.h.b16 %v1003
  %v1018 = vunpack.c.l.b16 %v1004
  %v1019 = vunpack.c.h.b16 %v1004
  %v1020 = vunpack.c.l.b16 %v1005
  %v1021 = vunpack.c.h.b16 %v1005
  %v1022 = vunpack.c.l.b16 %v1006
  %v1023 = vunpack.c.h.b16 %v1006
  %v1024 = vunpack.c.l.b16 %v1007
  %v1025 = vunpack.c.h.b16 %v1007
  %v1026 = vpack.c.b16 %v1016, %v1014
  %v1027 = vpack.c.b16 %v1017, %v1015
  %v1028 = vpack.c.b16 %v1020, %v1018
  %v1029 = vpack.c.b16 %v1021, %v1019
  %v1030 = vpack.c.b16 %v1024, %v1022
  %v1031 = vpack.c.b16 %v1025, %v1023
  %v1039 = vsel %vm241, %v1000, 0
  %1041 = vmatprep.subr.bf16.mxu0 %v1027
  %1042 = vmatpush1.bf16.msra.mxu0 %v1026
  %1043 = vmatprep.subr.bf16.mxu0 %v1029
  %1044 = vmatpush1.bf16.msra.mxu0 %v1028
  %1045 = vmatprep.subr.bf16.mxu0 %v1031
  %1046 = vmatpush1.bf16.msra.mxu0 %v1030
  %1047 = vmatprep.subr.bf16.mxu0 0
  %1048 = vmatpush1.bf16.msra.mxu0 0
  %1049 = vmatprep.subr.bf16.mxu0 0
  %1050 = vmatpush1.bf16.msra.mxu0 0
  %1051 = vmatprep.subr.bf16.mxu0 0
  %1052 = vmatpush1.bf16.msra.mxu0 0
  %1053 = vmatprep.subr.bf16.mxu0 0
  %1054 = vmatpush1.bf16.msra.mxu0 0
  %1055 = vmatprep.subr.bf16.mxu0 0
  %1056 = vmatpush1.bf16.msra.mxu0 0
  %1057 = vmatprep.subr.bf16.mxu0 0
  %1058 = vmatpush1.bf16.msra.mxu0 0
  %1059 = vmatprep.subr.bf16.mxu0 0
  %1060 = vmatpush1.bf16.msra.mxu0 0
  %1061 = vmatprep.subr.bf16.mxu0 0
  %1062 = vmatpush1.bf16.msra.mxu0 0
  %1063 = vmatprep.subr.bf16.mxu0 0
  %1064 = vmatpush1.bf16.msra.mxu0 0
  %1065 = vmatprep.subr.bf16.mxu0 0
  %1066 = vmatpush1.bf16.msra.mxu0 0
  %1067 = vmatprep.subr.bf16.mxu0 0
  %1068 = vmatpush1.bf16.msra.mxu0 0
  %1069 = vmatprep.subr.bf16.mxu0 0
  %1070 = vmatpush1.bf16.msra.mxu0 0
  %1071 = vmatprep.subr.bf16.mxu0 0
  %1072 = vmatpush1.bf16.msra.mxu0 0
  %1073 = vmatprep.mubr.bf16.mxu0 0
  %1074 = vmatmul.mubr.bf16.gmra.mrb[0].mxu0 %v1039
  %v1075 = vpop.f32.mrb[0].mxu0
  %v1076 = vadd.f32 0.0, %v1075
  %v1077 = vpop.f32.mrb[0].mxu0
  %v1078 = vadd.f32 0.0, %v1077
  %v1079 = vpop.f32.mrb[0].mxu0
  %v1080 = vpop.f32.mrb[0].mxu0
  %1081 = vdwg.mxu0
  %v1082 = vpack.c.bf16 %v1076, %v1076
  %1084 = vrot.lane.b32.xlu0 %v1082, 112
  %v1085 = vpop.permute.xlu0 %1084
  %v1087 = vsel %vm100, %v1082, 0
  %v1090 = vsel %vm100, %v1085, 0
  %1092 = vmatprep.subr.bf16.mxu0 0
  %1093 = vmatpush1.bf16.xpose.msra.mxu0 %v1090
  %1094 = vmatprep.subr.bf16.mxu0 0
  %1095 = vmatpush1.bf16.xpose.msra.mxu0 0
  %1096 = vmatprep.subr.bf16.mxu0 0
  %1097 = vmatpush1.bf16.xpose.msra.mxu0 0
  %1098 = vmatprep.subr.bf16.mxu0 0
  %1099 = vmatpush1.bf16.xpose.msra.mxu0 0
  %1100 = vmatprep.subr.bf16.mxu0 0
  %1101 = vmatpush1.bf16.xpose.msra.mxu0 0
  %1102 = vmatprep.subr.bf16.mxu0 0
  %1103 = vmatpush1.bf16.xpose.msra.mxu0 0
  %1104 = vmatprep.subr.bf16.mxu0 0
  %1105 = vmatpush1.bf16.xpose.msra.mxu0 0
  %1106 = vmatprep.subr.bf16.mxu0 0
  %1107 = vmatpush1.bf16.xpose.msra.mxu0 0
  %1108 = vmatprep.subr.bf16.mxu0 0
  %1109 = vmatpush1.bf16.xpose.msra.mxu0 0
  %1110 = vmatprep.subr.bf16.mxu0 0
  %1111 = vmatpush1.bf16.xpose.msra.mxu0 0
  %1112 = vmatprep.subr.bf16.mxu0 0
  %1113 = vmatpush1.bf16.xpose.msra.mxu0 0
  %1114 = vmatprep.subr.bf16.mxu0 0
  %1115 = vmatpush1.bf16.xpose.msra.mxu0 0
  %1116 = vmatprep.subr.bf16.mxu0 0
  %1117 = vmatpush1.bf16.xpose.msra.mxu0 0
  %1118 = vmatprep.subr.bf16.mxu0 0
  %1119 = vmatpush1.bf16.xpose.msra.mxu0 0
  %1120 = vmatprep.subr.bf16.mxu0 0
  %1121 = vmatpush1.bf16.xpose.msra.mxu0 0
  %1122 = vmatprep.subr.bf16.mxu0 0
  %1123 = vmatpush1.bf16.xpose.msra.mxu0 0
  %1124 = vmatprep.mubr.bf16.mxu0 0
  %1125 = vmatmul.mubr.bf16.gmra.mrb[0].mxu0 %v1087
  %v1126 = vpop.f32.mrb[0].mxu0
  %v1127 = vadd.f32 0.0, %v1126
  %v1128 = vpop.f32.mrb[0].mxu0
  %v1129 = vpop.f32.mrb[0].mxu0
  %v1130 = vpop.f32.mrb[0].mxu0
  %1131 = vdwg.mxu0
  %v1132 = vmul.f32 %v1127, 0.25
  %v1133 = vadd.f32 %v1132, %v174
  %v1134 = vsel %vm338, %v1133, -inf
  %1135 = vmax.xlane.f32.xlu0 %v1134
  %v1136 = vpop.xlane.xlu0 %1135
  %v1137 = vsub.f32 %v1133, %v1136
  %v1138 = vmul.f32 %v1137, 1.442695
  %v1139 = vpow.pop %v1138
  %v1140 = vsel %vm338, %v1139, 0.0
  %1141 = vadd.xlane.f32.xlu0 %v1140
  %v1142 = vpop.xlane.xlu0 %1141
  %v1143 = vrcp.pop %v1142
  %v1144 = vmul.f32 %v1139, %v1143
  %v1145 = vpack.c.bf16 %v1144, %v1144
  %1146 = vrot.lane.b32.xlu0 %v1082, 96
  %v1147 = vpop.permute.xlu0 %1146
  %v1149 = vsel %vm353, %v1145, 0
  %v1152 = vsel %vm357, %v1147, 0
  %1154 = vmatprep.subr.bf16.mxu0 0
  %1155 = vmatpush1.bf16.msra.mxu0 %v1152
  %1156 = vmatprep.subr.bf16.mxu0 0
  %1157 = vmatpush1.bf16.msra.mxu0 0
  %1158 = vmatprep.subr.bf16.mxu0 0
  %1159 = vmatpush1.bf16.msra.mxu0 0
  %1160 = vmatprep.subr.bf16.mxu0 0
  %1161 = vmatpush1.bf16.msra.mxu0 0
  %1162 = vmatprep.subr.bf16.mxu0 0
  %1163 = vmatpush1.bf16.msra.mxu0 0
  %1164 = vmatprep.subr.bf16.mxu0 0
  %1165 = vmatpush1.bf16.msra.mxu0 0
  %1166 = vmatprep.subr.bf16.mxu0 0
  %1167 = vmatpush1.bf16.msra.mxu0 0
  %1168 = vmatprep.subr.bf16.mxu0 0
  %1169 = vmatpush1.bf16.msra.mxu0 0
  %1170 = vmatprep.subr.bf16.mxu0 0
  %1171 = vmatpush1.bf16.msra.mxu0 0
  %1172 = vmatprep.subr.bf16.mxu0 0
  %1173 = vmatpush1.bf16.msra.mxu0 0
  %1174 = vmatprep.subr.bf16.mxu0 0
  %1175 = vmatpush1.bf16.msra.mxu0 0
  %1176 = vmatprep.subr.bf16.mxu0 0
  %1177 = vmatpush1.bf16.msra.mxu0 0
  %1178 = vmatprep.subr.bf16.mxu0 0
  %1179 = vmatpush1.bf16.msra.mxu0 0
  %1180 = vmatprep.subr.bf16.mxu0 0
  %1181 = vmatpush1.bf16.msra.mxu0 0
  %1182 = vmatprep.subr.bf16.mxu0 0
  %1183 = vmatpush1.bf16.msra.mxu0 0
  %1184 = vmatprep.subr.bf16.mxu0 0
  %1185 = vmatpush1.bf16.msra.mxu0 0
  %1186 = vmatprep.mubr.bf16.mxu0 0
  %1187 = vmatmul.mubr.bf16.gmra.mrb[0].mxu0 %v1149
  %v1188 = vpop.f32.mrb[0].mxu0
  %v1189 = vadd.f32 0.0, %v1188
  %v1190 = vpop.f32.mrb[0].mxu0
  %v1191 = vpop.f32.mrb[0].mxu0
  %v1192 = vpop.f32.mrb[0].mxu0
  %1193 = vdwg.mxu0
  %1194 = vrot.lane.b32.xlu0 %v1082, 80
  %v1195 = vpop.permute.xlu0 %1194
  %1196 = vrot.lane.b32.xlu0 %v1082, 64
  %v1197 = vpop.permute.xlu0 %1196
  %v1199 = vsel %vm100, %v1195, 0
  %v1202 = vsel %vm100, %v1197, 0
  %1204 = vmatprep.subr.bf16.mxu0 0
  %1205 = vmatpush1.bf16.xpose.msra.mxu0 %v1202
  %1206 = vmatprep.subr.bf16.mxu0 0
  %1207 = vmatpush1.bf16.xpose.msra.mxu0 0
  %1208 = vmatprep.subr.bf16.mxu0 0
  %1209 = vmatpush1.bf16.xpose.msra.mxu0 0
  %1210 = vmatprep.subr.bf16.mxu0 0
  %1211 = vmatpush1.bf16.xpose.msra.mxu0 0
  %1212 = vmatprep.subr.bf16.mxu0 0
  %1213 = vmatpush1.bf16.xpose.msra.mxu0 0
  %1214 = vmatprep.subr.bf16.mxu0 0
  %1215 = vmatpush1.bf16.xpose.msra.mxu0 0
  %1216 = vmatprep.subr.bf16.mxu0 0
  %1217 = vmatpush1.bf16.xpose.msra.mxu0 0
  %1218 = vmatprep.subr.bf16.mxu0 0
  %1219 = vmatpush1.bf16.xpose.msra.mxu0 0
  %1220 = vmatprep.subr.bf16.mxu0 0
  %1221 = vmatpush1.bf16.xpose.msra.mxu0 0
  %1222 = vmatprep.subr.bf16.mxu0 0
  %1223 = vmatpush1.bf16.xpose.msra.mxu0 0
  %1224 = vmatprep.subr.bf16.mxu0 0
  %1225 = vmatpush1.bf16.xpose.msra.mxu0 0
  %1226 = vmatprep.subr.bf16.mxu0 0
  %1227 = vmatpush1.bf16.xpose.msra.mxu0 0
  %1228 = vmatprep.subr.bf16.mxu0 0
  %1229 = vmatpush1.bf16.xpose.msra.mxu0 0
  %1230 = vmatprep.subr.bf16.mxu0 0
  %1231 = vmatpush1.bf16.xpose.msra.mxu0 0
  %1232 = vmatprep.subr.bf16.mxu0 0
  %1233 = vmatpush1.bf16.xpose.msra.mxu0 0
  %1234 = vmatprep.subr.bf16.mxu0 0
  %1235 = vmatpush1.bf16.xpose.msra.mxu0 0
  %1236 = vmatprep.mubr.bf16.mxu0 0
  %1237 = vmatmul.mubr.bf16.gmra.mrb[0].mxu0 %v1199
  %v1238 = vpop.f32.mrb[0].mxu0
  %v1239 = vadd.f32 0.0, %v1238
  %v1240 = vpop.f32.mrb[0].mxu0
  %v1241 = vpop.f32.mrb[0].mxu0
  %v1242 = vpop.f32.mrb[0].mxu0
  %1243 = vdwg.mxu0
  %v1244 = vmul.f32 %v1239, 0.25
  %v1245 = vadd.f32 %v1244, %v174
  %v1246 = vsel %vm338, %v1245, -inf
  %1247 = vmax.xlane.f32.xlu0 %v1246
  %v1248 = vpop.xlane.xlu0 %1247
  %v1249 = vsub.f32 %v1245, %v1248
  %v1250 = vmul.f32 %v1249, 1.442695
  %v1251 = vpow.pop %v1250
  %v1252 = vsel %vm338, %v1251, 0.0
  %1253 = vadd.xlane.f32.xlu0 %v1252
  %v1254 = vpop.xlane.xlu0 %1253
  %v1255 = vrcp.pop %v1254
  %v1256 = vmul.f32 %v1251, %v1255
  %v1257 = vpack.c.bf16 %v1256, %v1256
  %1258 = vrot.lane.b32.xlu0 %v1082, 48
  %v1259 = vpop.permute.xlu0 %1258
  %v1261 = vsel %vm353, %v1257, 0
  %v1264 = vsel %vm357, %v1259, 0
  %1266 = vmatprep.subr.bf16.mxu0 0
  %1267 = vmatpush1.bf16.msra.mxu0 %v1264
  %1268 = vmatprep.subr.bf16.mxu0 0
  %1269 = vmatpush1.bf16.msra.mxu0 0
  %1270 = vmatprep.subr.bf16.mxu0 0
  %1271 = vmatpush1.bf16.msra.mxu0 0
  %1272 = vmatprep.subr.bf16.mxu0 0
  %1273 = vmatpush1.bf16.msra.mxu0 0
  %1274 = vmatprep.subr.bf16.mxu0 0
  %1275 = vmatpush1.bf16.msra.mxu0 0
  %1276 = vmatprep.subr.bf16.mxu0 0
  %1277 = vmatpush1.bf16.msra.mxu0 0
  %1278 = vmatprep.subr.bf16.mxu0 0
  %1279 = vmatpush1.bf16.msra.mxu0 0
  %1280 = vmatprep.subr.bf16.mxu0 0
  %1281 = vmatpush1.bf16.msra.mxu0 0
  %1282 = vmatprep.subr.bf16.mxu0 0
  %1283 = vmatpush1.bf16.msra.mxu0 0
  %1284 = vmatprep.subr.bf16.mxu0 0
  %1285 = vmatpush1.bf16.msra.mxu0 0
  %1286 = vmatprep.subr.bf16.mxu0 0
  %1287 = vmatpush1.bf16.msra.mxu0 0
  %1288 = vmatprep.subr.bf16.mxu0 0
  %1289 = vmatpush1.bf16.msra.mxu0 0
  %1290 = vmatprep.subr.bf16.mxu0 0
  %1291 = vmatpush1.bf16.msra.mxu0 0
  %1292 = vmatprep.subr.bf16.mxu0 0
  %1293 = vmatpush1.bf16.msra.mxu0 0
  %1294 = vmatprep.subr.bf16.mxu0 0
  %1295 = vmatpush1.bf16.msra.mxu0 0
  %1296 = vmatprep.subr.bf16.mxu0 0
  %1297 = vmatpush1.bf16.msra.mxu0 0
  %1298 = vmatprep.mubr.bf16.mxu0 0
  %1299 = vmatmul.mubr.bf16.gmra.mrb[0].mxu0 %v1261
  %v1300 = vpop.f32.mrb[0].mxu0
  %v1301 = vadd.f32 0.0, %v1300
  %v1302 = vpop.f32.mrb[0].mxu0
  %v1303 = vpop.f32.mrb[0].mxu0
  %v1304 = vpop.f32.mrb[0].mxu0
  %1305 = vdwg.mxu0
  %v1306 = vpack.c.bf16 %v1078, %v1078
  %1307 = vrot.lane.b32.xlu0 %v1082, 32
  %v1308 = vpop.permute.xlu0 %1307
  %1309 = vrot.lane.b32.xlu0 %v1082, 16
  %v1310 = vpop.permute.xlu0 %1309
  %v1312 = vsel %vm100, %v1308, 0
  %v1315 = vsel %vm100, %v1310, 0
  %1317 = vmatprep.subr.bf16.mxu0 0
  %1318 = vmatpush1.bf16.xpose.msra.mxu0 %v1315
  %1319 = vmatprep.subr.bf16.mxu0 0
  %1320 = vmatpush1.bf16.xpose.msra.mxu0 0
  %1321 = vmatprep.subr.bf16.mxu0 0
  %1322 = vmatpush1.bf16.xpose.msra.mxu0 0
  %1323 = vmatprep.subr.bf16.mxu0 0
  %1324 = vmatpush1.bf16.xpose.msra.mxu0 0
  %1325 = vmatprep.subr.bf16.mxu0 0
  %1326 = vmatpush1.bf16.xpose.msra.mxu0 0
  %1327 = vmatprep.subr.bf16.mxu0 0
  %1328 = vmatpush1.bf16.xpose.msra.mxu0 0
  %1329 = vmatprep.subr.bf16.mxu0 0
  %1330 = vmatpush1.bf16.xpose.msra.mxu0 0
  %1331 = vmatprep.subr.bf16.mxu0 0
  %1332 = vmatpush1.bf16.xpose.msra.mxu0 0
  %1333 = vmatprep.subr.bf16.mxu0 0
  %1334 = vmatpush1.bf16.xpose.msra.mxu0 0
  %1335 = vmatprep.subr.bf16.mxu0 0
  %1336 = vmatpush1.bf16.xpose.msra.mxu0 0
  %1337 = vmatprep.subr.bf16.mxu0 0
  %1338 = vmatpush1.bf16.xpose.msra.mxu0 0
  %1339 = vmatprep.subr.bf16.mxu0 0
  %1340 = vmatpush1.bf16.xpose.msra.mxu0 0
  %1341 = vmatprep.subr.bf16.mxu0 0
  %1342 = vmatpush1.bf16.xpose.msra.mxu0 0
  %1343 = vmatprep.subr.bf16.mxu0 0
  %1344 = vmatpush1.bf16.xpose.msra.mxu0 0
  %1345 = vmatprep.subr.bf16.mxu0 0
  %1346 = vmatpush1.bf16.xpose.msra.mxu0 0
  %1347 = vmatprep.subr.bf16.mxu0 0
  %1348 = vmatpush1.bf16.xpose.msra.mxu0 0
  %1349 = vmatprep.mubr.bf16.mxu0 0
  %1350 = vmatmul.mubr.bf16.gmra.mrb[0].mxu0 %v1312
  %v1351 = vpop.f32.mrb[0].mxu0
  %v1352 = vadd.f32 0.0, %v1351
  %v1353 = vpop.f32.mrb[0].mxu0
  %v1354 = vpop.f32.mrb[0].mxu0
  %v1355 = vpop.f32.mrb[0].mxu0
  %1356 = vdwg.mxu0
  %v1357 = vmul.f32 %v1352, 0.25
  %v1358 = vadd.f32 %v1357, %v174
  %v1359 = vsel %vm338, %v1358, -inf
  %1360 = vmax.xlane.f32.xlu0 %v1359
  %v1361 = vpop.xlane.xlu0 %1360
  %v1362 = vsub.f32 %v1358, %v1361
  %v1363 = vmul.f32 %v1362, 1.442695
  %v1364 = vpow.pop %v1363
  %v1365 = vsel %vm338, %v1364, 0.0
  %1366 = vadd.xlane.f32.xlu0 %v1365
  %v1367 = vpop.xlane.xlu0 %1366
  %v1368 = vrcp.pop %v1367
  %v1369 = vmul.f32 %v1364, %v1368
  %v1370 = vpack.c.bf16 %v1369, %v1369
  %v1372 = vsel %vm353, %v1370, 0
  %v1375 = vsel %vm357, %v1306, 0
  %1377 = vmatprep.subr.bf16.mxu0 0
  %1378 = vmatpush1.bf16.msra.mxu0 %v1375
  %1379 = vmatprep.subr.bf16.mxu0 0
  %1380 = vmatpush1.bf16.msra.mxu0 0
  %1381 = vmatprep.subr.bf16.mxu0 0
  %1382 = vmatpush1.bf16.msra.mxu0 0
  %1383 = vmatprep.subr.bf16.mxu0 0
  %1384 = vmatpush1.bf16.msra.mxu0 0
  %1385 = vmatprep.subr.bf16.mxu0 0
  %1386 = vmatpush1.bf16.msra.mxu0 0
  %1387 = vmatprep.subr.bf16.mxu0 0
  %1388 = vmatpush1.bf16.msra.mxu0 0
  %1389 = vmatprep.subr.bf16.mxu0 0
  %1390 = vmatpush1.bf16.msra.mxu0 0
  %1391 = vmatprep.subr.bf16.mxu0 0
  %1392 = vmatpush1.bf16.msra.mxu0 0
  %1393 = vmatprep.subr.bf16.mxu0 0
  %1394 = vmatpush1.bf16.msra.mxu0 0
  %1395 = vmatprep.subr.bf16.mxu0 0
  %1396 = vmatpush1.bf16.msra.mxu0 0
  %1397 = vmatprep.subr.bf16.mxu0 0
  %1398 = vmatpush1.bf16.msra.mxu0 0
  %1399 = vmatprep.subr.bf16.mxu0 0
  %1400 = vmatpush1.bf16.msra.mxu0 0
  %1401 = vmatprep.subr.bf16.mxu0 0
  %1402 = vmatpush1.bf16.msra.mxu0 0
  %1403 = vmatprep.subr.bf16.mxu0 0
  %1404 = vmatpush1.bf16.msra.mxu0 0
  %1405 = vmatprep.subr.bf16.mxu0 0
  %1406 = vmatpush1.bf16.msra.mxu0 0
  %1407 = vmatprep.subr.bf16.mxu0 0
  %1408 = vmatpush1.bf16.msra.mxu0 0
  %1409 = vmatprep.mubr.bf16.mxu0 0
  %1410 = vmatmul.mubr.bf16.gmra.mrb[0].mxu0 %v1372
  %v1411 = vpop.f32.mrb[0].mxu0
  %v1412 = vadd.f32 0.0, %v1411
  %v1413 = vpop.f32.mrb[0].mxu0
  %v1414 = vpop.f32.mrb[0].mxu0
  %v1415 = vpop.f32.mrb[0].mxu0
  %1416 = vdwg.mxu0
  %1418 = vrot.lane.b32.xlu0 %v1301, 16
  %v1419 = vpop.permute.xlu0 %1418
  %1422 = vrot.lane.b32.xlu0 %v1412, 32
  %v1423 = vpop.permute.xlu0 %1422
  %v1425 = vsel %vm100, %v1189, %v1419
  %v1426 = vsel %vm633, %v1425, %v1423
  %v1427 = vpack.c.bf16 %v1426, %v1426
  %s1428 = scalar_lea.vmem %s8, 24
  %v1429 = vld [vmem:[%s1428] sm:$0xf]
  %v1430 = vld [vmem:[%s1428 + $0x4] sm:$0xf]
  %v1431 = vld [vmem:[%s1428 + $0x8] sm:$0xf]
  %v1432 = vld [vmem:[%s1428 + $0xc] sm:$0xf]
  %v1433 = vld [vmem:[%s1428 + $0x10] sm:$0xf]
  %v1434 = vld [vmem:[%s1428 + $0x14] sm:$0xf]
  %v1435 = vlaneseq
  %v1436 = vshrl.u32 %v1435, 7
  %v1437 = vsub.s32 1, %v1436
  %v1438 = vrot.slane %v177, %v1437
  %v1445 = vunpack.c.l.b16 %v1429
  %v1446 = vunpack.c.l.b16 %v1430
  %v1447 = vunpack.c.l.b16 %v1431
  %v1448 = vunpack.c.l.b16 %v1432
  %v1449 = vunpack.c.l.b16 %v1433
  %v1450 = vunpack.c.l.b16 %v1434
  %v1451 = vpack.c.b16 %v1446, %v1445
  %v1452 = vpack.c.b16 %v1448, %v1447
  %v1453 = vpack.c.b16 %v1450, %v1449
  %v1458 = vsel %vm241, %v1427, 0
  %1460 = vmatprep.subr.bf16.mxu0 0
  %1461 = vmatpush1.bf16.msra.mxu0 %v1451
  %1462 = vmatprep.subr.bf16.mxu0 0
  %1463 = vmatpush1.bf16.msra.mxu0 %v1452
  %1464 = vmatprep.subr.bf16.mxu0 0
  %1465 = vmatpush1.bf16.msra.mxu0 %v1453
  %1466 = vmatprep.subr.bf16.mxu0 0
  %1467 = vmatpush1.bf16.msra.mxu0 0
  %1468 = vmatprep.subr.bf16.mxu0 0
  %1469 = vmatpush1.bf16.msra.mxu0 0
  %1470 = vmatprep.subr.bf16.mxu0 0
  %1471 = vmatpush1.bf16.msra.mxu0 0
  %1472 = vmatprep.subr.bf16.mxu0 0
  %1473 = vmatpush1.bf16.msra.mxu0 0
  %1474 = vmatprep.subr.bf16.mxu0 0
  %1475 = vmatpush1.bf16.msra.mxu0 0
  %1476 = vmatprep.subr.bf16.mxu0 0
  %1477 = vmatpush1.bf16.msra.mxu0 0
  %1478 = vmatprep.subr.bf16.mxu0 0
  %1479 = vmatpush1.bf16.msra.mxu0 0
  %1480 = vmatprep.subr.bf16.mxu0 0
  %1481 = vmatpush1.bf16.msra.mxu0 0
  %1482 = vmatprep.subr.bf16.mxu0 0
  %1483 = vmatpush1.bf16.msra.mxu0 0
  %1484 = vmatprep.subr.bf16.mxu0 0
  %1485 = vmatpush1.bf16.msra.mxu0 0
  %1486 = vmatprep.subr.bf16.mxu0 0
  %1487 = vmatpush1.bf16.msra.mxu0 0
  %1488 = vmatprep.subr.bf16.mxu0 0
  %1489 = vmatpush1.bf16.msra.mxu0 0
  %1490 = vmatprep.subr.bf16.mxu0 0
  %1491 = vmatpush1.bf16.msra.mxu0 0
  %1492 = vmatprep.mubr.bf16.mxu0 0
  %1493 = vmatmul.mubr.bf16.gmra.mrb[0].mxu0 %v1458
  %v1494 = vpop.f32.mrb[0].mxu0
  %v1495 = vadd.f32 %v1438, %v1494
  %v1496 = vpop.f32.mrb[0].mxu0
  %v1497 = vpop.f32.mrb[0].mxu0
  %v1498 = vpop.f32.mrb[0].mxu0
  %1499 = vdwg.mxu0
  %v1500 = vadd.f32 %v976, %v1495
  %v1501 = vsel %vm179, %v1500, 0.0
  %1502 = vadd.xlane.f32.xlu0 %v1501
  %v1503 = vpop.xlane.xlu0 %1502
  %v1504 = vmul.f32 %v1503, %v183
  %v1505 = vsub.f32 %v1500, %v1504
  %v1506 = vmul.f32 %v1505, %v1505
  %v1507 = vsel %vm179, %v1506, 0.0
  %1508 = vadd.xlane.f32.xlu0 %v1507
  %v1509 = vpop.xlane.xlu0 %1508
  %v1510 = vmul.f32 %v1509, %v183
  %v1511 = vadd.f32 %v1510, 1e-05
  %v1512 = vrsqrt.pop %v1511
  %v1513 = vmul.f32 %v1505, %v1512
  %v1514 = vlaneseq
  %v1515 = vshrl.u32 %v1514, 7
  %v1516 = vsub.s32 2, %v1515
  %v1517 = vrot.slane %v177, %v1516
  %v1518 = vmul.f32 %v1513, %v1517
  %v1519 = vlaneseq
  %v1520 = vshrl.u32 %v1519, 7
  %v1521 = vsub.s32 3, %v1520
  %v1522 = vrot.slane %v177, %v1521
  %v1523 = vadd.f32 %v1518, %v1522
  %v1524 = vpack.c.bf16 %v1523, %v1523
  %s1525 = scalar_lea.vmem %s9, 48
  %v1526 = vld [vmem:[%s1525] sm:$0xff]
  %v1527 = vld [vmem:[%s1525 + $0x8] sm:$0xff]
  %v1528 = vld [vmem:[%s1525 + $0x10] sm:$0xff]
  %v1529 = vld [vmem:[%s1525 + $0x18] sm:$0xff]
  %v1530 = vld [vmem:[%s1525 + $0x20] sm:$0xff]
  %v1531 = vld [vmem:[%s1525 + $0x28] sm:$0xff]
  %v1532 = vlaneseq
  %v1533 = vshrl.u32 %v1532, 7
  %v1534 = vsub.s32 4, %v1533
  %v1535 = vrot.slane %v177, %v1534
  %v1536 = vlaneseq
  %v1537 = vshrl.u32 %v1536, 7
  %v1538 = vsub.s32 4, %v1537
  %v1539 = vrot.slane %v178, %v1538
  %v1546 = vunpack.c.l.b16 %v1526
  %v1547 = vunpack.c.h.b16 %v1526
  %v1548 = vunpack.c.l.b16 %v1527
  %v1549 = vunpack.c.h.b16 %v1527
  %v1550 = vunpack.c.l.b16 %v1528
  %v1551 = vunpack.c.h.b16 %v1528
  %v1552 = vunpack.c.l.b16 %v1529
  %v1553 = vunpack.c.h.b16 %v1529
  %v1554 = vunpack.c.l.b16 %v1530
  %v1555 = vunpack.c.h.b16 %v1530
  %v1556 = vunpack.c.l.b16 %v1531
  %v1557 = vunpack.c.h.b16 %v1531
  %v1558 = vpack.c.b16 %v1548, %v1546
  %v1559 = vpack.c.b16 %v1549, %v1547
  %v1560 = vpack.c.b16 %v1552, %v1550
  %v1561 = vpack.c.b16 %v1553, %v1551
  %v1562 = vpack.c.b16 %v1556, %v1554
  %v1563 = vpack.c.b16 %v1557, %v1555
  %v1571 = vsel %vm241, %v1524, 0
  %1573 = vmatprep.subr.bf16.mxu0 %v1559
  %1574 = vmatpush1.bf16.msra.mxu0 %v1558
  %1575 = vmatprep.subr.bf16.mxu0 %v1561
  %1576 = vmatpush1.bf16.msra.mxu0 %v1560
  %1577 = vmatprep.subr.bf16.mxu0 %v1563
  %1578 = vmatpush1.bf16.msra.mxu0 %v1562
  %1579 = vmatprep.subr.bf16.mxu0 0
  %1580 = vmatpush1.bf16.msra.mxu0 0
  %1581 = vmatprep.subr.bf16.mxu0 0
  %1582 = vmatpush1.bf16.msra.mxu0 0
  %1583 = vmatprep.subr.bf16.mxu0 0
  %1584 = vmatpush1.bf16.msra.mxu0 0
  %1585 = vmatprep.subr.bf16.mxu0 0
  %1586 = vmatpush1.bf16.msra.mxu0 0
  %1587 = vmatprep.subr.bf16.mxu0 0
  %1588 = vmatpush1.bf16.msra.mxu0 0
  %1589 = vmatprep.subr.bf16.mxu0 0
  %1590 = vmatpush1.bf16.msra.mxu0 0
  %1591 = vmatprep.subr.bf16.mxu0 0
  %1592 = vmatpush1.bf16.msra.mxu0 0
  %1593 = vmatprep.subr.bf16.mxu0 0
  %1594 = vmatpush1.bf16.msra.mxu0 0
  %1595 = vmatprep.subr.bf16.mxu0 0
  %1596 = vmatpush1.bf16.msra.mxu0 0
  %1597 = vmatprep.subr.bf16.mxu0 0
  %1598 = vmatpush1.bf16.msra.mxu0 0
  %1599 = vmatprep.subr.bf16.mxu0 0
  %1600 = vmatpush1.bf16.msra.mxu0 0
  %1601 = vmatprep.subr.bf16.mxu0 0
  %1602 = vmatpush1.bf16.msra.mxu0 0
  %1603 = vmatprep.subr.bf16.mxu0 0
  %1604 = vmatpush1.bf16.msra.mxu0 0
  %1605 = vmatprep.mubr.bf16.mxu0 0
  %1606 = vmatmul.mubr.bf16.gmra.mrb[0].mxu0 %v1571
  %v1607 = vpop.f32.mrb[0].mxu0
  %v1608 = vadd.f32 %v1535, %v1607
  %v1609 = vpop.f32.mrb[0].mxu0
  %v1610 = vadd.f32 %v1539, %v1609
  %v1611 = vpop.f32.mrb[0].mxu0
  %v1612 = vpop.f32.mrb[0].mxu0
  %1613 = vdwg.mxu0
  %v1614 = vmul.f32 %v1608, 0.5
  %v1615 = vmul.f32 %v1610, 0.5
  %v1616 = vmul.f32 %v1608, 0.70710677
  %v1617 = vmul.f32 %v1610, 0.70710677
  %v1618 = verf.f32.pop %v1616
  %v1619 = verf.f32.pop %v1617
  %v1620 = vadd.f32 %v1618, 1.0
  %v1621 = vadd.f32 %v1619, 1.0
  %v1622 = vmul.f32 %v1614, %v1620
  %v1623 = vmul.f32 %v1615, %v1621
  %v1624 = vpack.c.bf16 %v1622, %v1622
  %v1625 = vpack.c.bf16 %v1623, %v1623
  %s1626 = scalar_lea.vmem %s10, 96
  %v1627 = vld [vmem:[%s1626] sm:$0xf]
  %v1628 = vld [vmem:[%s1626 + $0x4] sm:$0xf]
  %v1629 = vld [vmem:[%s1626 + $0x8] sm:$0xf]
  %v1630 = vld [vmem:[%s1626 + $0xc] sm:$0xf]
  %v1631 = vld [vmem:[%s1626 + $0x10] sm:$0xf]
  %v1632 = vld [vmem:[%s1626 + $0x14] sm:$0xf]
  %v1633 = vld [vmem:[%s1626 + $0x18] sm:$0xf]
  %v1634 = vld [vmem:[%s1626 + $0x1c] sm:$0xf]
  %v1635 = vld [vmem:[%s1626 + $0x20] sm:$0xf]
  %v1636 = vld [vmem:[%s1626 + $0x24] sm:$0xf]
  %v1637 = vld [vmem:[%s1626 + $0x28] sm:$0xf]
  %v1638 = vld [vmem:[%s1626 + $0x2c] sm:$0xf]
  %v1639 = vld [vmem:[%s1626 + $0x30] sm:$0xf]
  %v1640 = vld [vmem:[%s1626 + $0x34] sm:$0xf]
  %v1641 = vld [vmem:[%s1626 + $0x38] sm:$0xf]
  %v1642 = vld [vmem:[%s1626 + $0x3c] sm:$0xf]
  %v1643 = vld [vmem:[%s1626 + $0x40] sm:$0xf]
  %v1644 = vld [vmem:[%s1626 + $0x44] sm:$0xf]
  %v1645 = vld [vmem:[%s1626 + $0x48] sm:$0xf]
  %v1646 = vld [vmem:[%s1626 + $0x4c] sm:$0xf]
  %v1647 = vld [vmem:[%s1626 + $0x50] sm:$0xf]
  %v1648 = vld [vmem:[%s1626 + $0x54] sm:$0xf]
  %v1649 = vld [vmem:[%s1626 + $0x58] sm:$0xf]
  %v1650 = vld [vmem:[%s1626 + $0x5c] sm:$0xf]
  %v1651 = vlaneseq
  %v1652 = vshrl.u32 %v1651, 7
  %v1653 = vsub.s32 5, %v1652
  %v1654 = vrot.slane %v177, %v1653
  %v1679 = vunpack.c.l.b16 %v1627
  %v1680 = vunpack.c.l.b16 %v1628
  %v1681 = vunpack.c.l.b16 %v1629
  %v1682 = vunpack.c.l.b16 %v1630
  %v1683 = vunpack.c.l.b16 %v1631
  %v1684 = vunpack.c.l.b16 %v1632
  %v1685 = vunpack.c.l.b16 %v1633
  %v1686 = vunpack.c.l.b16 %v1634
  %v1687 = vunpack.c.l.b16 %v1635
  %v1688 = vunpack.c.l.b16 %v1636
  %v1689 = vunpack.c.l.b16 %v1637
  %v1690 = vunpack.c.l.b16 %v1638
  %v1691 = vunpack.c.l.b16 %v1639
  %v1692 = vunpack.c.l.b16 %v1640
  %v1693 = vunpack.c.l.b16 %v1641
  %v1694 = vunpack.c.l.b16 %v1642
  %v1695 = vunpack.c.l.b16 %v1643
  %v1696 = vunpack.c.l.b16 %v1644
  %v1697 = vunpack.c.l.b16 %v1645
  %v1698 = vunpack.c.l.b16 %v1646
  %v1699 = vunpack.c.l.b16 %v1647
  %v1700 = vunpack.c.l.b16 %v1648
  %v1701 = vunpack.c.l.b16 %v1649
  %v1702 = vunpack.c.l.b16 %v1650
  %v1703 = vpack.c.b16 %v1680, %v1679
  %v1704 = vpack.c.b16 %v1682, %v1681
  %v1705 = vpack.c.b16 %v1684, %v1683
  %v1706 = vpack.c.b16 %v1686, %v1685
  %v1707 = vpack.c.b16 %v1688, %v1687
  %v1708 = vpack.c.b16 %v1690, %v1689
  %v1709 = vpack.c.b16 %v1692, %v1691
  %v1710 = vpack.c.b16 %v1694, %v1693
  %v1711 = vpack.c.b16 %v1696, %v1695
  %v1712 = vpack.c.b16 %v1698, %v1697
  %v1713 = vpack.c.b16 %v1700, %v1699
  %v1714 = vpack.c.b16 %v1702, %v1701
  %v1728 = vsel %vm932, %v1625, 0
  %1730 = vmatprep.subr.bf16.mxu0 0
  %1731 = vmatpush1.bf16.msra.mxu0 %v1703
  %1732 = vmatprep.subr.bf16.mxu0 0
  %1733 = vmatpush1.bf16.msra.mxu0 %v1704
  %1734 = vmatprep.subr.bf16.mxu0 0
  %1735 = vmatpush1.bf16.msra.mxu0 %v1705
  %1736 = vmatprep.subr.bf16.mxu0 0
  %1737 = vmatpush1.bf16.msra.mxu0 %v1706
  %1738 = vmatprep.subr.bf16.mxu0 0
  %1739 = vmatpush1.bf16.msra.mxu0 %v1707
  %1740 = vmatprep.subr.bf16.mxu0 0
  %1741 = vmatpush1.bf16.msra.mxu0 %v1708
  %1742 = vmatprep.subr.bf16.mxu0 0
  %1743 = vmatpush1.bf16.msra.mxu0 %v1709
  %1744 = vmatprep.subr.bf16.mxu0 0
  %1745 = vmatpush1.bf16.msra.mxu0 %v1710
  %1746 = vmatprep.subr.bf16.mxu0 0
  %1747 = vmatpush1.bf16.msra.mxu0 %v1711
  %1748 = vmatprep.subr.bf16.mxu0 0
  %1749 = vmatpush1.bf16.msra.mxu0 %v1712
  %1750 = vmatprep.subr.bf16.mxu0 0
  %1751 = vmatpush1.bf16.msra.mxu0 %v1713
  %1752 = vmatprep.subr.bf16.mxu0 0
  %1753 = vmatpush1.bf16.msra.mxu0 %v1714
  %1754 = vmatprep.subr.bf16.mxu0 0
  %1755 = vmatpush1.bf16.msra.mxu0 0
  %1756 = vmatprep.subr.bf16.mxu0 0
  %1757 = vmatpush1.bf16.msra.mxu0 0
  %1758 = vmatprep.subr.bf16.mxu0 0
  %1759 = vmatpush1.bf16.msra.mxu0 0
  %1760 = vmatprep.subr.bf16.mxu0 0
  %1761 = vmatpush1.bf16.msra.mxu0 0
  %1762 = vmatprep.mubr.bf16.mxu0 %v1728
  %1763 = vmatmul.mubr.bf16.gmra.mrb[0].mxu0 %v1624
  %v1764 = vpop.f32.mrb[0].mxu0
  %v1765 = vadd.f32 %v1654, %v1764
  %v1766 = vpop.f32.mrb[0].mxu0
  %v1767 = vpop.f32.mrb[0].mxu0
  %v1768 = vpop.f32.mrb[0].mxu0
  %1769 = vdwg.mxu0
  %v1770 = vadd.f32 %v1500, %v1765
  %v1771 = vsel %vm179, %v1770, 0.0
  %1772 = vadd.xlane.f32.xlu0 %v1771
  %v1773 = vpop.xlane.xlu0 %1772
  %v1774 = vmul.f32 %v1773, %v183
  %v1775 = vsub.f32 %v1770, %v1774
  %v1776 = vmul.f32 %v1775, %v1775
  %v1777 = vsel %vm179, %v1776, 0.0
  %1778 = vadd.xlane.f32.xlu0 %v1777
  %v1779 = vpop.xlane.xlu0 %1778
  %v1780 = vmul.f32 %v1779, %v183
  %v1781 = vadd.f32 %v1780, 1e-05
  %v1782 = vrsqrt.pop %v1781
  %v1783 = vmul.f32 %v1775, %v1782
  %v1784 = vlaneseq
  %v1785 = vshrl.u32 %v1784, 7
  %v1786 = vsub.s32 6, %v1785
  %v1787 = vrot.slane %v177, %v1786
  %v1788 = vmul.f32 %v1783, %v1787
  %v1789 = vlaneseq
  %v1790 = vshrl.u32 %v1789, 7
  %v1791 = vsub.s32 7, %v1790
  %v1792 = vrot.slane %v177, %v1791
  %v1793 = vadd.f32 %v1788, %v1792
  %1794 = vst.msk [vmem:[%s11] sm:$0x3f] %vm179, %v1793
  // Predicated region
  $region46: #{_forward_jit.1} parent=0 // pred_check
    _
  $region47: #{_forward_jit.1} parent=0 // pred_check_branch
    %1796 = sbr.rel (0) target = $region49
  $region48: #{_forward_jit.1} parent=0 // pred_region
    _
  $region49: #{_forward_jit.1} parent=0 // pred_fallthru
    _
  // Predicated region
  $region50: #{_forward_jit.1} parent=0 // pred_check
    _
  $region51: #{_forward_jit.1} parent=0 // pred_check_branch
    %1798 = sbr.rel (0) target = $region53
  $region52: #{_forward_jit.1} parent=0 // pred_region
    _
  $region53: #{_forward_jit.1} parent=0 // pred_fallthru
    _

</llo_original>
